<compile_context>
chip_gen: v5e
topology: v5e:2x2
jax: 0.10.0
libtpu: 0.0.40
codegen_flags: <defaults>
</compile_context>

<pallas_src>
import functools
import math

import jax
import jax.numpy as jnp
from jax.experimental import pallas as pl
from jax.experimental.pallas import tpu as pltpu


# ----------------------------- kernel helpers ------------------------------

def _gelu(x):
    # tanh approximation of GELU (tanh executes on the EUP slot).
    # TODO(synk): PyTorch nn.GELU default is exact erf GELU; tanh approximation
    # kept for guaranteed Mosaic lowering (FeedForward body was not provided).
    c = math.sqrt(2.0 / math.pi)
    return 0.5 * x * (1.0 + jnp.tanh(c * (x + 0.044715 * x * x * x)))


def _layernorm(x, gamma, beta, eps=1e-5):
    mu = jnp.mean(x, axis=-1, keepdims=True)
    var = jnp.mean((x - mu) ** 2, axis=-1, keepdims=True)
    return (x - mu) * jax.lax.rsqrt(var + eps) * gamma + beta


# ------------------------------ Pallas kernel -------------------------------

def encoder_kernel(x_ref,
                   ln1_g_ref, ln1_b_ref, wqkv_ref, bqkv_ref, wo_ref, bo_ref,
                   ln2_g_ref, ln2_b_ref, w1_ref, b1_ref, w2_ref, b2_ref,
                   out_ref, acc_ref, *, num_heads):
    """One grid step = one (batch element, layer) pair."""
    layer = pl.program_id(1)
    last_layer = pl.num_programs(1) - 1

    # Load the batch element's activation into the resident f32 accumulator
    # only at the first layer; it persists in VMEM across the L axis.
    @pl.when(layer == 0)
    def _():
        acc_ref[...] = x_ref[...].astype(jnp.float32)

    x = acc_ref[...]                                  # (N, D) f32
    N, D = x.shape
    hd = D // num_heads
    scale = 1.0 / math.sqrt(hd)

    # --- multi-head self attention (pre-norm inside the submodule) ---------
    h = _layernorm(x, ln1_g_ref[...], ln1_b_ref[...])            # f32
    qkv = jnp.dot(h.astype(jnp.bfloat16), wqkv_ref[...],
                  preferred_element_type=jnp.float32) + bqkv_ref[...]  # (N, 3D) f32

    def split_heads(t):                               # (N, D) -> (H, N, hd)
        return t.reshape(N, num_heads, hd).transpose(1, 0, 2)

    q = split_heads(qkv[:, 0:D])
    k = split_heads(qkv[:, D:2 * D])
    v = split_heads(qkv[:, 2 * D:3 * D])

    # Heads-batched attention: scores and context via batched MXU matmuls.
    s = jnp.einsum('hqd,hkd->hqk',
                   q.astype(jnp.bfloat16), k.astype(jnp.bfloat16),
                   preferred_element_type=jnp.float32) * scale   # (H, N, N) f32
    s = s - jnp.max(s, axis=-1, keepdims=True)
    p = jnp.exp(s)
    denom = jnp.sum(p, axis=-1, keepdims=True)
    p = p * pl.reciprocal(denom, approx=True)                    # softmax in f32
    o = jnp.einsum('hqk,hkd->hqd',
                   p.astype(jnp.bfloat16), v.astype(jnp.bfloat16),
                   preferred_element_type=jnp.float32)           # (H, N, hd) f32

    attn = o.transpose(1, 0, 2).reshape(N, D)                    # (N, D)
    attn = jnp.dot(attn.astype(jnp.bfloat16), wo_ref[...],
                   preferred_element_type=jnp.float32) + bo_ref[...]

    x = x + attn                                      # residual 1 (f32)

    # --- feed forward (pre-norm inside the submodule) -----------------------
    h = _layernorm(x, ln2_g_ref[...], ln2_b_ref[...])
    h = jnp.dot(h.astype(jnp.bfloat16), w1_ref[...],
                preferred_element_type=jnp.float32) + b1_ref[...]
    h = _gelu(h)
    h = jnp.dot(h.astype(jnp.bfloat16), w2_ref[...],
                preferred_element_type=jnp.float32) + b2_ref[...]

    new_x = x + h                                     # residual 2 (f32)
    acc_ref[...] = new_x

    # Write back to HBM only once per batch element, after the last layer.
    @pl.when(layer == last_layer)
    def _():
        out_ref[...] = new_x.astype(out_ref.dtype)


# ------------------------------ JAX wrapper ---------------------------------

def encoder(x, p, num_heads):
    """Apply all stacked transformer layers in a single fused pallas_call."""
    B, N, D = x.shape
    L = p["wqkv"].shape[0]
    hidden = p["w1"].shape[-1]
    kernel = functools.partial(encoder_kernel, num_heads=num_heads)

    def wspec(shape):
        # Layer-indexed weight block; leading L dim squeezed out in the kernel.
        return pl.BlockSpec((None,) + shape,
                            lambda b, l, _nd=len(shape): (l,) + (0,) * _nd)

    in_specs = [
        pl.BlockSpec((None, N, D), lambda b, l: (b, 0, 0)),   # x: one batch element
        wspec((1, D)), wspec((1, D)),                         # ln1 gamma / beta
        wspec((D, 3 * D)), wspec((1, 3 * D)),                 # qkv weight / bias
        wspec((D, D)), wspec((1, D)),                         # out-proj weight / bias
        wspec((1, D)), wspec((1, D)),                         # ln2 gamma / beta
        wspec((D, hidden)), wspec((1, hidden)),               # mlp fc1 weight / bias
        wspec((hidden, D)), wspec((1, D)),                    # mlp fc2 weight / bias
    ]
    out_spec = pl.BlockSpec((None, N, D), lambda b, l: (b, 0, 0))

    return pl.pallas_call(
        kernel,
        out_shape=jax.ShapeDtypeStruct((B, N, D), x.dtype),
        grid=(B, L),
        in_specs=in_specs,
        out_specs=out_spec,
        scratch_shapes=[pltpu.VMEM((N, D), jnp.float32)],     # resident activation
        compiler_params=pltpu.CompilerParams(
            dimension_semantics=("parallel", "arbitrary"),
            vmem_limit_bytes=64 * 1024 * 1024,
        ),
    )(x,
      p["ln1_g"], p["ln1_b"], p["wqkv"], p["bqkv"], p["wo"], p["bo"],
      p["ln2_g"], p["ln2_b"], p["w1"], p["b1"], p["w2"], p["b2"])


def init_params(key, embed_dim, num_layers=12, mlp_ratio=4):
    """Stacked per-layer parameters; matmul weights in bf16, the rest f32."""
    hidden = mlp_ratio * embed_dim
    D, L = embed_dim, num_layers
    ks = jax.random.split(key, 4)
    bf16 = jnp.bfloat16
    f32 = jnp.float32
    return dict(
        ln1_g=jnp.ones((L, 1, D), f32),
        ln1_b=jnp.zeros((L, 1, D), f32),
        wqkv=(0.02 * jax.random.normal(ks[0], (L, D, 3 * D), f32)).astype(bf16),
        bqkv=jnp.zeros((L, 1, 3 * D), f32),
        wo=(0.02 * jax.random.normal(ks[1], (L, D, D), f32)).astype(bf16),
        bo=jnp.zeros((L, 1, D), f32),
        ln2_g=jnp.ones((L, 1, D), f32),
        ln2_b=jnp.zeros((L, 1, D), f32),
        w1=(0.02 * jax.random.normal(ks[2], (L, D, hidden), f32)).astype(bf16),
        b1=jnp.zeros((L, 1, hidden), f32),
        w2=(0.02 * jax.random.normal(ks[3], (L, hidden, D), f32)).astype(bf16),
        b2=jnp.zeros((L, 1, D), f32),
    )


# ---------------------------------- main ------------------------------------

if __name__ == "__main__":
    B, N, D, H = 2, 8, 32, 4          # batch, num_patches, embed_dim, num_heads

    key = jax.random.PRNGKey(0)
    k_x, k_p = jax.random.split(key)
    x = jax.random.normal(k_x, (B, N, D), jnp.float32)
    params = init_params(k_p, D, num_layers=12)

    y = encoder(x, params, num_heads=H)
    y = jax.block_until_ready(y)

    assert y.shape == (B, N, D) and y.dtype == jnp.float32
    assert bool(jnp.all(jnp.isfinite(y)))
    print("KERNEL_OK")
</pallas_src>

<mosaic_0001>
module attributes {stable_mosaic.version = 11 : i64} {
  func.func @encoder_kernel(%arg0: i32, %arg1: i32, %arg2: memref<1x8x32xf32, #tpu.memory_space<vmem>>, %arg3: memref<1x1x32xf32, #tpu.memory_space<vmem>>, %arg4: memref<1x1x32xf32, #tpu.memory_space<vmem>>, %arg5: memref<1x32x96xbf16, #tpu.memory_space<vmem>>, %arg6: memref<1x1x96xf32, #tpu.memory_space<vmem>>, %arg7: memref<1x32x32xbf16, #tpu.memory_space<vmem>>, %arg8: memref<1x1x32xf32, #tpu.memory_space<vmem>>, %arg9: memref<1x1x32xf32, #tpu.memory_space<vmem>>, %arg10: memref<1x1x32xf32, #tpu.memory_space<vmem>>, %arg11: memref<1x32x128xbf16, #tpu.memory_space<vmem>>, %arg12: memref<1x1x128xf32, #tpu.memory_space<vmem>>, %arg13: memref<1x128x32xbf16, #tpu.memory_space<vmem>>, %arg14: memref<1x1x32xf32, #tpu.memory_space<vmem>>, %arg15: memref<1x8x32xf32, #tpu.memory_space<vmem>>, %arg16: memref<8x32xf32, #tpu.memory_space<vmem>>) attributes {dimension_semantics = [#tpu.dimension_semantics<parallel>, #tpu.dimension_semantics<arbitrary>], iteration_bounds = array<i64: 2, 12>, scalar_prefetch = 0 : i64, scratch_operands = 1 : i64, tpu.core_type = #tpu.core_type<tc>, window_params = [{transform_indices = @transform_0, window_bounds = array<i64: 1, 8, 32>}, {transform_indices = @transform_1, window_bounds = array<i64: 1, 1, 32>}, {transform_indices = @transform_2, window_bounds = array<i64: 1, 1, 32>}, {transform_indices = @transform_3, window_bounds = array<i64: 1, 32, 96>}, {transform_indices = @transform_4, window_bounds = array<i64: 1, 1, 96>}, {transform_indices = @transform_5, window_bounds = array<i64: 1, 32, 32>}, {transform_indices = @transform_6, window_bounds = array<i64: 1, 1, 32>}, {transform_indices = @transform_7, window_bounds = array<i64: 1, 1, 32>}, {transform_indices = @transform_8, window_bounds = array<i64: 1, 1, 32>}, {transform_indices = @transform_9, window_bounds = array<i64: 1, 32, 128>}, {transform_indices = @transform_10, window_bounds = array<i64: 1, 1, 128>}, {transform_indices = @transform_11, window_bounds = array<i64: 1, 128, 32>}, {transform_indices = @transform_12, window_bounds = array<i64: 1, 1, 32>}, {transform_indices = @transform_13, window_bounds = array<i64: 1, 8, 32>}]} {
    %c0_i32 = arith.constant 0 : i32
    %0 = arith.cmpi eq, %arg1, %c0_i32 : i32
    %1 = arith.extui %0 : i1 to i32
    %c0_i32_0 = arith.constant 0 : i32
    %2 = arith.cmpi ne, %1, %c0_i32_0 : i32
    scf.if %2 {
      %c0_63 = arith.constant 0 : index
      %c0_64 = arith.constant 0 : index
      %c0_65 = arith.constant 0 : index
      %136 = vector.load %arg2[%c0_63, %c0_64, %c0_65] : memref<1x8x32xf32, #tpu.memory_space<vmem>>, vector<1x8x32xf32>
      %137 = vector.shape_cast %136 : vector<1x8x32xf32> to vector<8x32xf32>
      %c0_66 = arith.constant 0 : index
      %c0_67 = arith.constant 0 : index
      %138 = vector.load %arg16[%c0_66, %c0_67] : memref<8x32xf32, #tpu.memory_space<vmem>>, vector<8x32xf32>
      tpu.vector_store %arg16[%c0_66, %c0_67], %137 {strides = array<i32>} : memref<8x32xf32, #tpu.memory_space<vmem>>, vector<8x32xf32>,
    } else {
    }
    %c0 = arith.constant 0 : index
    %c0_1 = arith.constant 0 : index
    %3 = vector.load %arg16[%c0, %c0_1] : memref<8x32xf32, #tpu.memory_space<vmem>>, vector<8x32xf32>
    %c0_2 = arith.constant 0 : index
    %c0_3 = arith.constant 0 : index
    %c0_4 = arith.constant 0 : index
    %4 = vector.load %arg3[%c0_2, %c0_3, %c0_4] : memref<1x1x32xf32, #tpu.memory_space<vmem>>, vector<1x1x32xf32>
    %5 = vector.shape_cast %4 : vector<1x1x32xf32> to vector<1x32xf32>
    %c0_5 = arith.constant 0 : index
    %c0_6 = arith.constant 0 : index
    %c0_7 = arith.constant 0 : index
    %6 = vector.load %arg4[%c0_5, %c0_6, %c0_7] : memref<1x1x32xf32, #tpu.memory_space<vmem>>, vector<1x1x32xf32>
    %7 = vector.shape_cast %6 : vector<1x1x32xf32> to vector<1x32xf32>
    %cst = arith.constant dense<0.000000e+00> : vector<8xf32>
    %8 = vector.multi_reduction <add>, %3, %cst [1] : vector<8x32xf32> to vector<8xf32>
    %9 = vector.shape_cast %8 : vector<8xf32> to vector<8x1xf32>
    %cst_8 = arith.constant 3.200000e+01 : f32
    %10 = vector.broadcast %cst_8 : f32 to vector<8x1xf32>
    %11 = arith.divf %9, %10 : vector<8x1xf32>
    %12 = vector.broadcast %11 : vector<8x1xf32> to vector<8x32xf32>
    %13 = arith.subf %3, %12 : vector<8x32xf32>
    %14 = arith.mulf %13, %13 : vector<8x32xf32>
    %cst_9 = arith.constant dense<0.000000e+00> : vector<8xf32>
    %15 = vector.multi_reduction <add>, %14, %cst_9 [1] : vector<8x32xf32> to vector<8xf32>
    %16 = vector.shape_cast %15 : vector<8xf32> to vector<8x1xf32>
    %cst_10 = arith.constant 3.200000e+01 : f32
    %17 = vector.broadcast %cst_10 : f32 to vector<8x1xf32>
    %18 = arith.divf %16, %17 : vector<8x1xf32>
    %19 = vector.broadcast %11 : vector<8x1xf32> to vector<8x32xf32>
    %20 = arith.subf %3, %19 : vector<8x32xf32>
    %cst_11 = arith.constant 9.99999974E-6 : f32
    %21 = vector.broadcast %cst_11 : f32 to vector<8x1xf32>
    %22 = arith.addf %18, %21 : vector<8x1xf32>
    %23 = math.rsqrt %22 : vector<8x1xf32>
    %24 = vector.broadcast %23 : vector<8x1xf32> to vector<8x32xf32>
    %25 = arith.mulf %20, %24 : vector<8x32xf32>
    %26 = vector.broadcast %5 : vector<1x32xf32> to vector<8x32xf32>
    %27 = arith.mulf %25, %26 : vector<8x32xf32>
    %28 = vector.broadcast %7 : vector<1x32xf32> to vector<8x32xf32>
    %29 = arith.addf %27, %28 : vector<8x32xf32>
    %30 = arith.truncf %29 : vector<8x32xf32> to vector<8x32xbf16>
    %c0_12 = arith.constant 0 : index
    %c0_13 = arith.constant 0 : index
    %c0_14 = arith.constant 0 : index
    %31 = vector.load %arg5[%c0_12, %c0_13, %c0_14] : memref<1x32x96xbf16, #tpu.memory_space<vmem>>, vector<1x32x96xbf16>
    %32 = vector.shape_cast %31 : vector<1x32x96xbf16> to vector<32x96xbf16>
    %cst_15 = arith.constant dense<0.000000e+00> : vector<8x96xf32>
    %33 = tpu.matmul %30, %32, %cst_15 {dimension_numbers = #tpu.dot_dimension_numbers<[1], [0], [0], [1], [0, 0, 1, 1], [], []>} : vector<8x32xbf16>, vector<32x96xbf16>, vector<8x96xf32> -> vector<8x96xf32>
    %c0_16 = arith.constant 0 : index
    %c0_17 = arith.constant 0 : index
    %c0_18 = arith.constant 0 : index
    %34 = vector.load %arg6[%c0_16, %c0_17, %c0_18] : memref<1x1x96xf32, #tpu.memory_space<vmem>>, vector<1x1x96xf32>
    %35 = vector.shape_cast %34 : vector<1x1x96xf32> to vector<1x96xf32>
    %36 = vector.broadcast %35 : vector<1x96xf32> to vector<8x96xf32>
    %37 = arith.addf %33, %36 : vector<8x96xf32>
    %38 = vector.extract_strided_slice %37 {offsets = [0, 0], sizes = [8, 32], strides = [1, 1]} : vector<8x96xf32> to vector<8x32xf32>
    %39 = vector.shape_cast %38 : vector<8x32xf32> to vector<8x4x8xf32>
    %40 = tpu.transpose %39, [1, 0, 2] : vector<8x4x8xf32> -> vector<4x8x8xf32>
    %41 = vector.extract_strided_slice %37 {offsets = [0, 32], sizes = [8, 32], strides = [1, 1]} : vector<8x96xf32> to vector<8x32xf32>
    %42 = vector.shape_cast %41 : vector<8x32xf32> to vector<8x4x8xf32>
    %43 = tpu.transpose %42, [1, 0, 2] : vector<8x4x8xf32> -> vector<4x8x8xf32>
    %44 = vector.extract_strided_slice %37 {offsets = [0, 64], sizes = [8, 32], strides = [1, 1]} : vector<8x96xf32> to vector<8x32xf32>
    %45 = vector.shape_cast %44 : vector<8x32xf32> to vector<8x4x8xf32>
    %46 = tpu.transpose %45, [1, 0, 2] : vector<8x4x8xf32> -> vector<4x8x8xf32>
    %47 = arith.truncf %40 : vector<4x8x8xf32> to vector<4x8x8xbf16>
    %48 = arith.truncf %43 : vector<4x8x8xf32> to vector<4x8x8xbf16>
    "tpu.trace_start"() <{level = 10 : i32, message = "hqd,hkd->hqk"}> : () -> ()
    %cst_19 = arith.constant dense<0.000000e+00> : vector<4x8x8xf32>
    %49 = tpu.matmul %47, %48, %cst_19 {dimension_numbers = #tpu.dot_dimension_numbers<[2], [2], [1], [1], [0, 0, 0, 1, 1, 1], [0], [0]>} : vector<4x8x8xbf16>, vector<4x8x8xbf16>, vector<4x8x8xf32> -> vector<4x8x8xf32>
    "tpu.trace_stop"() : () -> ()
    %cst_20 = arith.constant 0.353553385 : f32
    %50 = vector.broadcast %cst_20 : f32 to vector<4x8x8xf32>
    %51 = arith.mulf %49, %50 : vector<4x8x8xf32>
    %cst_21 = arith.constant dense<0xFF800000> : vector<4x8xf32>
    %52 = vector.multi_reduction <maximumf>, %51, %cst_21 [2] : vector<4x8x8xf32> to vector<4x8xf32>
    %53 = vector.shape_cast %52 : vector<4x8xf32> to vector<4x8x1xf32>
    %54 = vector.broadcast %53 : vector<4x8x1xf32> to vector<4x8x8xf32>
    %55 = arith.subf %51, %54 : vector<4x8x8xf32>
    %56 = math.exp %55 : vector<4x8x8xf32>
    %cst_22 = arith.constant dense<0.000000e+00> : vector<4x8xf32>
    %57 = vector.multi_reduction <add>, %56, %cst_22 [2] : vector<4x8x8xf32> to vector<4x8xf32>
    %58 = vector.shape_cast %57 : vector<4x8xf32> to vector<4x8x1xf32>
    %59 = tpu.reciprocal %58 {approx = true} : vector<4x8x1xf32> -> vector<4x8x1xf32>
    %60 = vector.broadcast %59 : vector<4x8x1xf32> to vector<4x8x8xf32>
    %61 = arith.mulf %56, %60 : vector<4x8x8xf32>
    %62 = arith.truncf %61 : vector<4x8x8xf32> to vector<4x8x8xbf16>
    %63 = arith.truncf %46 : vector<4x8x8xf32> to vector<4x8x8xbf16>
    "tpu.trace_start"() <{level = 10 : i32, message = "hqk,hkd->hqd"}> : () -> ()
    %cst_23 = arith.constant dense<0.000000e+00> : vector<4x8x8xf32>
    %64 = tpu.matmul %62, %63, %cst_23 {dimension_numbers = #tpu.dot_dimension_numbers<[2], [1], [1], [2], [0, 0, 0, 1, 1, 2], [0], [0]>} : vector<4x8x8xbf16>, vector<4x8x8xbf16>, vector<4x8x8xf32> -> vector<4x8x8xf32>
    "tpu.trace_stop"() : () -> ()
    %65 = tpu.transpose %64, [1, 0, 2] : vector<4x8x8xf32> -> vector<8x4x8xf32>
    %66 = vector.shape_cast %65 : vector<8x4x8xf32> to vector<8x32xf32>
    %67 = arith.truncf %66 : vector<8x32xf32> to vector<8x32xbf16>
    %c0_24 = arith.constant 0 : index
    %c0_25 = arith.constant 0 : index
    %c0_26 = arith.constant 0 : index
    %68 = vector.load %arg7[%c0_24, %c0_25, %c0_26] : memref<1x32x32xbf16, #tpu.memory_space<vmem>>, vector<1x32x32xbf16>
    %69 = vector.shape_cast %68 : vector<1x32x32xbf16> to vector<32x32xbf16>
    %cst_27 = arith.constant dense<0.000000e+00> : vector<8x32xf32>
    %70 = tpu.matmul %67, %69, %cst_27 {dimension_numbers = #tpu.dot_dimension_numbers<[1], [0], [0], [1], [0, 0, 1, 1], [], []>} : vector<8x32xbf16>, vector<32x32xbf16>, vector<8x32xf32> -> vector<8x32xf32>
    %c0_28 = arith.constant 0 : index
    %c0_29 = arith.constant 0 : index
    %c0_30 = arith.constant 0 : index
    %71 = vector.load %arg8[%c0_28, %c0_29, %c0_30] : memref<1x1x32xf32, #tpu.memory_space<vmem>>, vector<1x1x32xf32>
    %72 = vector.shape_cast %71 : vector<1x1x32xf32> to vector<1x32xf32>
    %73 = vector.broadcast %72 : vector<1x32xf32> to vector<8x32xf32>
    %74 = arith.addf %70, %73 : vector<8x32xf32>
    %75 = arith.addf %3, %74 : vector<8x32xf32>
    %c0_31 = arith.constant 0 : index
    %c0_32 = arith.constant 0 : index
    %c0_33 = arith.constant 0 : index
    %76 = vector.load %arg9[%c0_31, %c0_32, %c0_33] : memref<1x1x32xf32, #tpu.memory_space<vmem>>, vector<1x1x32xf32>
    %77 = vector.shape_cast %76 : vector<1x1x32xf32> to vector<1x32xf32>
    %c0_34 = arith.constant 0 : index
    %c0_35 = arith.constant 0 : index
    %c0_36 = arith.constant 0 : index
    %78 = vector.load %arg10[%c0_34, %c0_35, %c0_36] : memref<1x1x32xf32, #tpu.memory_space<vmem>>, vector<1x1x32xf32>
    %79 = vector.shape_cast %78 : vector<1x1x32xf32> to vector<1x32xf32>
    %cst_37 = arith.constant dense<0.000000e+00> : vector<8xf32>
    %80 = vector.multi_reduction <add>, %75, %cst_37 [1] : vector<8x32xf32> to vector<8xf32>
    %81 = vector.shape_cast %80 : vector<8xf32> to vector<8x1xf32>
    %cst_38 = arith.constant 3.200000e+01 : f32
    %82 = vector.broadcast %cst_38 : f32 to vector<8x1xf32>
    %83 = arith.divf %81, %82 : vector<8x1xf32>
    %84 = vector.broadcast %83 : vector<8x1xf32> to vector<8x32xf32>
    %85 = arith.subf %75, %84 : vector<8x32xf32>
    %86 = arith.mulf %85, %85 : vector<8x32xf32>
    %cst_39 = arith.constant dense<0.000000e+00> : vector<8xf32>
    %87 = vector.multi_reduction <add>, %86, %cst_39 [1] : vector<8x32xf32> to vector<8xf32>
    %88 = vector.shape_cast %87 : vector<8xf32> to vector<8x1xf32>
    %cst_40 = arith.constant 3.200000e+01 : f32
    %89 = vector.broadcast %cst_40 : f32 to vector<8x1xf32>
    %90 = arith.divf %88, %89 : vector<8x1xf32>
    %91 = vector.broadcast %83 : vector<8x1xf32> to vector<8x32xf32>
    %92 = arith.subf %75, %91 : vector<8x32xf32>
    %cst_41 = arith.constant 9.99999974E-6 : f32
    %93 = vector.broadcast %cst_41 : f32 to vector<8x1xf32>
    %94 = arith.addf %90, %93 : vector<8x1xf32>
    %95 = math.rsqrt %94 : vector<8x1xf32>
    %96 = vector.broadcast %95 : vector<8x1xf32> to vector<8x32xf32>
    %97 = arith.mulf %92, %96 : vector<8x32xf32>
    %98 = vector.broadcast %77 : vector<1x32xf32> to vector<8x32xf32>
    %99 = arith.mulf %97, %98 : vector<8x32xf32>
    %100 = vector.broadcast %79 : vector<1x32xf32> to vector<8x32xf32>
    %101 = arith.addf %99, %100 : vector<8x32xf32>
    %102 = arith.truncf %101 : vector<8x32xf32> to vector<8x32xbf16>
    %c0_42 = arith.constant 0 : index
    %c0_43 = arith.constant 0 : index
    %c0_44 = arith.constant 0 : index
    %103 = vector.load %arg11[%c0_42, %c0_43, %c0_44] : memref<1x32x128xbf16, #tpu.memory_space<vmem>>, vector<1x32x128xbf16>
    %104 = vector.shape_cast %103 : vector<1x32x128xbf16> to vector<32x128xbf16>
    %cst_45 = arith.constant dense<0.000000e+00> : vector<8x128xf32>
    %105 = tpu.matmul %102, %104, %cst_45 {dimension_numbers = #tpu.dot_dimension_numbers<[1], [0], [0], [1], [0, 0, 1, 1], [], []>} : vector<8x32xbf16>, vector<32x128xbf16>, vector<8x128xf32> -> vector<8x128xf32>
    %c0_46 = arith.constant 0 : index
    %c0_47 = arith.constant 0 : index
    %c0_48 = arith.constant 0 : index
    %106 = vector.load %arg12[%c0_46, %c0_47, %c0_48] : memref<1x1x128xf32, #tpu.memory_space<vmem>>, vector<1x1x128xf32>
    %107 = vector.shape_cast %106 : vector<1x1x128xf32> to vector<1x128xf32>
    %108 = vector.broadcast %107 : vector<1x128xf32> to vector<8x128xf32>
    %109 = arith.addf %105, %108 : vector<8x128xf32>
    %cst_49 = arith.constant 5.000000e-01 : f32
    %110 = vector.broadcast %cst_49 : f32 to vector<8x128xf32>
    %111 = arith.mulf %110, %109 : vector<8x128xf32>
    %cst_50 = arith.constant 4.471500e-02 : f32
    %112 = vector.broadcast %cst_50 : f32 to vector<8x128xf32>
    %113 = arith.mulf %112, %109 : vector<8x128xf32>
    %114 = arith.mulf %113, %109 : vector<8x128xf32>
    %115 = arith.mulf %114, %109 : vector<8x128xf32>
    %116 = arith.addf %109, %115 : vector<8x128xf32>
    %cst_51 = arith.constant 0.797884583 : f32
    %117 = vector.broadcast %cst_51 : f32 to vector<8x128xf32>
    %118 = arith.mulf %117, %116 : vector<8x128xf32>
    %119 = math.tanh %118 : vector<8x128xf32>
    %cst_52 = arith.constant 1.000000e+00 : f32
    %120 = vector.broadcast %cst_52 : f32 to vector<8x128xf32>
    %121 = arith.addf %120, %119 : vector<8x128xf32>
    %122 = arith.mulf %111, %121 : vector<8x128xf32>
    %123 = arith.truncf %122 : vector<8x128xf32> to vector<8x128xbf16>
    %c0_53 = arith.constant 0 : index
    %c0_54 = arith.constant 0 : index
    %c0_55 = arith.constant 0 : index
    %124 = vector.load %arg13[%c0_53, %c0_54, %c0_55] : memref<1x128x32xbf16, #tpu.memory_space<vmem>>, vector<1x128x32xbf16>
    %125 = vector.shape_cast %124 : vector<1x128x32xbf16> to vector<128x32xbf16>
    %cst_56 = arith.constant dense<0.000000e+00> : vector<8x32xf32>
    %126 = tpu.matmul %123, %125, %cst_56 {dimension_numbers = #tpu.dot_dimension_numbers<[1], [0], [0], [1], [0, 0, 1, 1], [], []>} : vector<8x128xbf16>, vector<128x32xbf16>, vector<8x32xf32> -> vector<8x32xf32>
    %c0_57 = arith.constant 0 : index
    %c0_58 = arith.constant 0 : index
    %c0_59 = arith.constant 0 : index
    %127 = vector.load %arg14[%c0_57, %c0_58, %c0_59] : memref<1x1x32xf32, #tpu.memory_space<vmem>>, vector<1x1x32xf32>
    %128 = vector.shape_cast %127 : vector<1x1x32xf32> to vector<1x32xf32>
    %129 = vector.broadcast %128 : vector<1x32xf32> to vector<8x32xf32>
    %130 = arith.addf %126, %129 : vector<8x32xf32>
    %131 = arith.addf %75, %130 : vector<8x32xf32>
    %c0_60 = arith.constant 0 : index
    %c0_61 = arith.constant 0 : index
    %132 = vector.load %arg16[%c0_60, %c0_61] : memref<8x32xf32, #tpu.memory_space<vmem>>, vector<8x32xf32>
    tpu.vector_store %arg16[%c0_60, %c0_61], %131 {strides = array<i32>} : memref<8x32xf32, #tpu.memory_space<vmem>>, vector<8x32xf32>,
    %c11_i32 = arith.constant 11 : i32
    %133 = arith.cmpi eq, %arg1, %c11_i32 : i32
    %134 = arith.extui %133 : i1 to i32
    %c0_i32_62 = arith.constant 0 : i32
    %135 = arith.cmpi ne, %134, %c0_i32_62 : i32
    scf.if %135 {
      %c0_63 = arith.constant 0 : index
      %c0_64 = arith.constant 0 : index
      %c0_65 = arith.constant 0 : index
      %136 = vector.load %arg15[%c0_63, %c0_64, %c0_65] : memref<1x8x32xf32, #tpu.memory_space<vmem>>, vector<1x8x32xf32>
      %137 = vector.shape_cast %136 : vector<1x8x32xf32> to vector<8x32xf32>
      %138 = vector.shape_cast %131 : vector<8x32xf32> to vector<1x8x32xf32>
      tpu.vector_store %arg15[%c0_63, %c0_64, %c0_65], %138 {strides = array<i32>} : memref<1x8x32xf32, #tpu.memory_space<vmem>>, vector<1x8x32xf32>,
    } else {
    }
    return
  }
  func.func @transform_0(%arg0: i32, %arg1: i32) -> (i32, i32, i32) {
    %c0_i32 = arith.constant 0 : i32
    %c0_i32_0 = arith.constant 0 : i32
    %c0_i32_1 = arith.constant 0 : i32
    return %arg0, %c0_i32, %c0_i32_0 : i32, i32, i32
  }
  func.func @transform_1(%arg0: i32, %arg1: i32) -> (i32, i32, i32) {
    %c0_i32 = arith.constant 0 : i32
    %c0_i32_0 = arith.constant 0 : i32
    %c0_i32_1 = arith.constant 0 : i32
    return %arg1, %c0_i32, %c0_i32_0 : i32, i32, i32
  }
  func.func @transform_2(%arg0: i32, %arg1: i32) -> (i32, i32, i32) {
    %c0_i32 = arith.constant 0 : i32
    %c0_i32_0 = arith.constant 0 : i32
    %c0_i32_1 = arith.constant 0 : i32
    return %arg1, %c0_i32, %c0_i32_0 : i32, i32, i32
  }
  func.func @transform_3(%arg0: i32, %arg1: i32) -> (i32, i32, i32) {
    %c0_i32 = arith.constant 0 : i32
    %c0_i32_0 = arith.constant 0 : i32
    %c0_i32_1 = arith.constant 0 : i32
    return %arg1, %c0_i32, %c0_i32_0 : i32, i32, i32
  }
  func.func @transform_4(%arg0: i32, %arg1: i32) -> (i32, i32, i32) {
    %c0_i32 = arith.constant 0 : i32
    %c0_i32_0 = arith.constant 0 : i32
    %c0_i32_1 = arith.constant 0 : i32
    return %arg1, %c0_i32, %c0_i32_0 : i32, i32, i32
  }
  func.func @transform_5(%arg0: i32, %arg1: i32) -> (i32, i32, i32) {
    %c0_i32 = arith.constant 0 : i32
    %c0_i32_0 = arith.constant 0 : i32
    %c0_i32_1 = arith.constant 0 : i32
    return %arg1, %c0_i32, %c0_i32_0 : i32, i32, i32
  }
  func.func @transform_6(%arg0: i32, %arg1: i32) -> (i32, i32, i32) {
    %c0_i32 = arith.constant 0 : i32
    %c0_i32_0 = arith.constant 0 : i32
    %c0_i32_1 = arith.constant 0 : i32
    return %arg1, %c0_i32, %c0_i32_0 : i32, i32, i32
  }
  func.func @transform_7(%arg0: i32, %arg1: i32) -> (i32, i32, i32) {
    %c0_i32 = arith.constant 0 : i32
    %c0_i32_0 = arith.constant 0 : i32
    %c0_i32_1 = arith.constant 0 : i32
    return %arg1, %c0_i32, %c0_i32_0 : i32, i32, i32
  }
  func.func @transform_8(%arg0: i32, %arg1: i32) -> (i32, i32, i32) {
    %c0_i32 = arith.constant 0 : i32
    %c0_i32_0 = arith.constant 0 : i32
    %c0_i32_1 = arith.constant 0 : i32
    return %arg1, %c0_i32, %c0_i32_0 : i32, i32, i32
  }
  func.func @transform_9(%arg0: i32, %arg1: i32) -> (i32, i32, i32) {
    %c0_i32 = arith.constant 0 : i32
    %c0_i32_0 = arith.constant 0 : i32
    %c0_i32_1 = arith.constant 0 : i32
    return %arg1, %c0_i32, %c0_i32_0 : i32, i32, i32
  }
  func.func @transform_10(%arg0: i32, %arg1: i32) -> (i32, i32, i32) {
    %c0_i32 = arith.constant 0 : i32
    %c0_i32_0 = arith.constant 0 : i32
    %c0_i32_1 = arith.constant 0 : i32
    return %arg1, %c0_i32, %c0_i32_0 : i32, i32, i32
  }
  func.func @transform_11(%arg0: i32, %arg1: i32) -> (i32, i32, i32) {
    %c0_i32 = arith.constant 0 : i32
    %c0_i32_0 = arith.constant 0 : i32
    %c0_i32_1 = arith.constant 0 : i32
    return %arg1, %c0_i32, %c0_i32_0 : i32, i32, i32
  }
  func.func @transform_12(%arg0: i32, %arg1: i32) -> (i32, i32, i32) {
    %c0_i32 = arith.constant 0 : i32
    %c0_i32_0 = arith.constant 0 : i32
    %c0_i32_1 = arith.constant 0 : i32
    return %arg1, %c0_i32, %c0_i32_0 : i32, i32, i32
  }
  func.func @transform_13(%arg0: i32, %arg1: i32) -> (i32, i32, i32) {
    %c0_i32 = arith.constant 0 : i32
    %c0_i32_0 = arith.constant 0 : i32
    %c0_i32_1 = arith.constant 0 : i32
    return %arg0, %c0_i32, %c0_i32_0 : i32, i32, i32
  }
}

</mosaic_0001>

<llo_original>
// kernel: tpu_custom_call.1
$region0: #{tpu_custom_call.1}
  #allocation0 [shape = 'u32[]', space=smem, size = 0x4, offset = 0x4, fixed_abs, tag = 'smem constant byte address 0x4 - core index']
  #allocation1 [shape = 'u32[72,128]{1,0:T(1,128)}', space=vmem, size = 0x9000, scoped, tag = 'internal scratch']
  #allocation2 [shape = 'f32[8,32]{1,0:T(8,128)}', space=vmem, size = 0x1000, scoped, tag = 'scratch operand']
  %s0 = inlined_call_operand.vmem [shape: f32[2,8,32], index: 0, kind: input, shape index: {}]
  %s1 = inlined_call_operand.vmem [shape: f32[12,1,32], index: 1, kind: input, shape index: {}]
  %s2 = inlined_call_operand.vmem [shape: f32[12,1,32], index: 2, kind: input, shape index: {}]
  %s3 = inlined_call_operand.vmem [shape: bf16[12,32,96], index: 3, kind: input, shape index: {}]
  %s4 = inlined_call_operand.vmem [shape: f32[12,1,96], index: 4, kind: input, shape index: {}]
  %s5 = inlined_call_operand.vmem [shape: bf16[12,32,32], index: 5, kind: input, shape index: {}]
  %s6 = inlined_call_operand.vmem [shape: f32[12,1,32], index: 6, kind: input, shape index: {}]
  %s7 = inlined_call_operand.vmem [shape: f32[12,1,32], index: 7, kind: input, shape index: {}]
  %s8 = inlined_call_operand.vmem [shape: f32[12,1,32], index: 8, kind: input, shape index: {}]
  %s9 = inlined_call_operand.vmem [shape: bf16[12,32,128], index: 9, kind: input, shape index: {}]
  %s10 = inlined_call_operand.vmem [shape: f32[12,1,128], index: 10, kind: input, shape index: {}]
  %s11 = inlined_call_operand.vmem [shape: bf16[12,128,32], index: 11, kind: input, shape index: {}]
  %s12 = inlined_call_operand.vmem [shape: f32[12,1,32], index: 12, kind: input, shape index: {}]
  %s13 = inlined_call_operand.hbm [shape: f32[2,8,32], index: 13, kind: output, shape index: {}]
  %s14 = sld [smem:[#allocation0]]
  $region93: #{tpu_custom_call.1} parent=0
    _
  %s16 = ssub.s32 1, %s14
  %s17 = scalar_select 0, %s16, %s14
  $region1: #{tpu_custom_call.1} parent=0
    #allocation3 [shape = 'u8[8192]{0}', space=vmem, size = 0x2000, scoped, tag = 'output window, operand 0']
    #allocation4 [shape = 's32[2]{0}', space=sflag, size = 0x8, scoped, tag = 'scoped memory for tpu_custom_call.1']
    %18 = vsyncpa [#allocation4], 0
    %s19 = scalar_lea.sflag [#allocation4], 1
    %20 = vsyncpa %s19, 0
    loop: start=0, step=1, limit=26
    $region2: #{tpu_custom_call.1} parent=1 // loop_pre_header
      _
    $region3: #{tpu_custom_call.1} parent=1 // loop_header
      %s22 = sphi 0, %s26
      %p23 = scmp.ge.s32.totalorder %s22, 26
      %s29 = sphi 0, %s41
      %s30 = sphi 0, %s37
      %s31 = sphi 0, %s29
      %s32 = sphi 0, %s30
      %s33 = sphi 0, %s31
      %s34 = sphi 0, %s32
      %s44 = sphi 0, %s46
      %s47 = sphi 0, %s44
      %s48 = sphi 0, %s47
      %s64 = sphi 0, %s48
      %s70 = sphi 0, %s72
      %s73 = sphi 0, %s70
      %s74 = sphi 0, %s73
      %s90 = sphi 0, %s74
      %s96 = sphi 0, %s98
      %s99 = sphi 0, %s96
      %s100 = sphi 0, %s99
      %s116 = sphi 0, %s100
      %s122 = sphi 0, %s124
      %s125 = sphi 0, %s122
      %s126 = sphi 0, %s125
      %s142 = sphi 0, %s126
      %s148 = sphi 0, %s150
      %s151 = sphi 0, %s148
      %s152 = sphi 0, %s151
      %s168 = sphi 0, %s152
      %s174 = sphi 0, %s176
      %s177 = sphi 0, %s174
      %s178 = sphi 0, %s177
      %s194 = sphi 0, %s178
      %s200 = sphi 0, %s202
      %s203 = sphi 0, %s200
      %s204 = sphi 0, %s203
      %s220 = sphi 0, %s204
      %s226 = sphi 0, %s228
      %s229 = sphi 0, %s226
      %s230 = sphi 0, %s229
      %s246 = sphi 0, %s230
      %s252 = sphi 0, %s254
      %s255 = sphi 0, %s252
      %s256 = sphi 0, %s255
      %s272 = sphi 0, %s256
      %s278 = sphi 0, %s280
      %s281 = sphi 0, %s278
      %s282 = sphi 0, %s281
      %s298 = sphi 0, %s282
      %s304 = sphi 0, %s306
      %s307 = sphi 0, %s304
      %s308 = sphi 0, %s307
      %s324 = sphi 0, %s308
      %s330 = sphi 0, %s332
      %s333 = sphi 0, %s330
      %s334 = sphi 0, %s333
      %s350 = sphi 0, %s334
      %s356 = sphi 0, %s358
      %s359 = sphi 0, %s356
      %s360 = sphi 0, %s359
      %s376 = sphi 0, %s360
      %s382 = sphi 0, %s384
      %s385 = sphi 0, %s382
      %s386 = sphi 0, %s385
      %s402 = sphi 0, %s386
    $region4: #{tpu_custom_call.1} parent=1 // loop_header_branch
      %25 = sbr.rel (%p23) target = $region8
    $region5: #{tpu_custom_call.1} parent=1 // loop_body
      %s27 = ssub.s32 %s22, 1
      %s28 = ssub.s32 %s22, 2
      %s35 = sadd.s32 1, %s30
      %p36 = scmp.ge.s32.totalorder %s35, 12
      %s37 = scalar_select %p36, 0, %s35
      %s38 = sadd.s32 1, %s29
      %s39 = scalar_select %p36, %s38, %s29
      %p40 = scmp.ge.s32.totalorder %s39, 2
      %s41 = scalar_select %p40, 0, %s39
      %s42 = ssub.s32 %s29, %s41
      %p43 = scmp.eq.s32.totalorder %s42, 0
      %s45 = sadd.s32 %s44, 1
      %s46 = scalar_select %p43, %s44, %s45
      %p49 = pneg %p43
      %p50 = scmp.eq.s32.totalorder %s22, 23
      %p51 = por %p49, %p50
      %p52 = scmp.ne.s32.totalorder %s44, %s47
      %p53 = scmp.eq.s32.totalorder %s22, 0
      %p54 = por %p52, %p53
      %p55 = scmp.ne.s32.totalorder %s44, %s47
      %p56 = scmp.eq.s32.totalorder %s27, 23
      %p57 = por %p55, %p56
      %p58 = scmp.ne.s32.totalorder %s47, %s48
      %p59 = scmp.eq.s32.totalorder %s27, 0
      %p60 = por %p58, %p59
      %p61 = scmp.ne.s32.totalorder %s47, %s48
      %p62 = scmp.eq.s32.totalorder %s28, 23
      %p63 = por %p61, %p62
      %p65 = scmp.ne.s32.totalorder %s48, %s64
      %p66 = scmp.eq.s32.totalorder %s28, 0
      %p67 = por %p65, %p66
      %s68 = ssub.s32 %s30, %s37
      %p69 = scmp.eq.s32.totalorder %s68, 0
      %s71 = sadd.s32 %s70, 1
      %s72 = scalar_select %p69, %s70, %s71
      %p75 = pneg %p69
      %p76 = scmp.eq.s32.totalorder %s22, 23
      %p77 = por %p75, %p76
      %p78 = scmp.ne.s32.totalorder %s70, %s73
      %p79 = scmp.eq.s32.totalorder %s22, 0
      %p80 = por %p78, %p79
      %p81 = scmp.ne.s32.totalorder %s70, %s73
      %p82 = scmp.eq.s32.totalorder %s27, 23
      %p83 = por %p81, %p82
      %p84 = scmp.ne.s32.totalorder %s73, %s74
      %p85 = scmp.eq.s32.totalorder %s27, 0
      %p86 = por %p84, %p85
      %p87 = scmp.ne.s32.totalorder %s73, %s74
      %p88 = scmp.eq.s32.totalorder %s28, 23
      %p89 = por %p87, %p88
      %p91 = scmp.ne.s32.totalorder %s74, %s90
      %p92 = scmp.eq.s32.totalorder %s28, 0
      %p93 = por %p91, %p92
      %s94 = ssub.s32 %s30, %s37
      %p95 = scmp.eq.s32.totalorder %s94, 0
      %s97 = sadd.s32 %s96, 1
      %s98 = scalar_select %p95, %s96, %s97
      %p101 = pneg %p95
      %p102 = scmp.eq.s32.totalorder %s22, 23
      %p103 = por %p101, %p102
      %p104 = scmp.ne.s32.totalorder %s96, %s99
      %p105 = scmp.eq.s32.totalorder %s22, 0
      %p106 = por %p104, %p105
      %p107 = scmp.ne.s32.totalorder %s96, %s99
      %p108 = scmp.eq.s32.totalorder %s27, 23
      %p109 = por %p107, %p108
      %p110 = scmp.ne.s32.totalorder %s99, %s100
      %p111 = scmp.eq.s32.totalorder %s27, 0
      %p112 = por %p110, %p111
      %p113 = scmp.ne.s32.totalorder %s99, %s100
      %p114 = scmp.eq.s32.totalorder %s28, 23
      %p115 = por %p113, %p114
      %p117 = scmp.ne.s32.totalorder %s100, %s116
      %p118 = scmp.eq.s32.totalorder %s28, 0
      %p119 = por %p117, %p118
      %s120 = ssub.s32 %s30, %s37
      %p121 = scmp.eq.s32.totalorder %s120, 0
      %s123 = sadd.s32 %s122, 1
      %s124 = scalar_select %p121, %s122, %s123
      %p127 = pneg %p121
      %p128 = scmp.eq.s32.totalorder %s22, 23
      %p129 = por %p127, %p128
      %p130 = scmp.ne.s32.totalorder %s122, %s125
      %p131 = scmp.eq.s32.totalorder %s22, 0
      %p132 = por %p130, %p131
      %p133 = scmp.ne.s32.totalorder %s122, %s125
      %p134 = scmp.eq.s32.totalorder %s27, 23
      %p135 = por %p133, %p134
      %p136 = scmp.ne.s32.totalorder %s125, %s126
      %p137 = scmp.eq.s32.totalorder %s27, 0
      %p138 = por %p136, %p137
      %p139 = scmp.ne.s32.totalorder %s125, %s126
      %p140 = scmp.eq.s32.totalorder %s28, 23
      %p141 = por %p139, %p140
      %p143 = scmp.ne.s32.totalorder %s126, %s142
      %p144 = scmp.eq.s32.totalorder %s28, 0
      %p145 = por %p143, %p144
      %s146 = ssub.s32 %s30, %s37
      %p147 = scmp.eq.s32.totalorder %s146, 0
      %s149 = sadd.s32 %s148, 1
      %s150 = scalar_select %p147, %s148, %s149
      %p153 = pneg %p147
      %p154 = scmp.eq.s32.totalorder %s22, 23
      %p155 = por %p153, %p154
      %p156 = scmp.ne.s32.totalorder %s148, %s151
      %p157 = scmp.eq.s32.totalorder %s22, 0
      %p158 = por %p156, %p157
      %p159 = scmp.ne.s32.totalorder %s148, %s151
      %p160 = scmp.eq.s32.totalorder %s27, 23
      %p161 = por %p159, %p160
      %p162 = scmp.ne.s32.totalorder %s151, %s152
      %p163 = scmp.eq.s32.totalorder %s27, 0
      %p164 = por %p162, %p163
      %p165 = scmp.ne.s32.totalorder %s151, %s152
      %p166 = scmp.eq.s32.totalorder %s28, 23
      %p167 = por %p165, %p166
      %p169 = scmp.ne.s32.totalorder %s152, %s168
      %p170 = scmp.eq.s32.totalorder %s28, 0
      %p171 = por %p169, %p170
      %s172 = ssub.s32 %s30, %s37
      %p173 = scmp.eq.s32.totalorder %s172, 0
      %s175 = sadd.s32 %s174, 1
      %s176 = scalar_select %p173, %s174, %s175
      %p179 = pneg %p173
      %p180 = scmp.eq.s32.totalorder %s22, 23
      %p181 = por %p179, %p180
      %p182 = scmp.ne.s32.totalorder %s174, %s177
      %p183 = scmp.eq.s32.totalorder %s22, 0
      %p184 = por %p182, %p183
      %p185 = scmp.ne.s32.totalorder %s174, %s177
      %p186 = scmp.eq.s32.totalorder %s27, 23
      %p187 = por %p185, %p186
      %p188 = scmp.ne.s32.totalorder %s177, %s178
      %p189 = scmp.eq.s32.totalorder %s27, 0
      %p190 = por %p188, %p189
      %p191 = scmp.ne.s32.totalorder %s177, %s178
      %p192 = scmp.eq.s32.totalorder %s28, 23
      %p193 = por %p191, %p192
      %p195 = scmp.ne.s32.totalorder %s178, %s194
      %p196 = scmp.eq.s32.totalorder %s28, 0
      %p197 = por %p195, %p196
      %s198 = ssub.s32 %s30, %s37
      %p199 = scmp.eq.s32.totalorder %s198, 0
      %s201 = sadd.s32 %s200, 1
      %s202 = scalar_select %p199, %s200, %s201
      %p205 = pneg %p199
      %p206 = scmp.eq.s32.totalorder %s22, 23
      %p207 = por %p205, %p206
      %p208 = scmp.ne.s32.totalorder %s200, %s203
      %p209 = scmp.eq.s32.totalorder %s22, 0
      %p210 = por %p208, %p209
      %p211 = scmp.ne.s32.totalorder %s200, %s203
      %p212 = scmp.eq.s32.totalorder %s27, 23
      %p213 = por %p211, %p212
      %p214 = scmp.ne.s32.totalorder %s203, %s204
      %p215 = scmp.eq.s32.totalorder %s27, 0
      %p216 = por %p214, %p215
      %p217 = scmp.ne.s32.totalorder %s203, %s204
      %p218 = scmp.eq.s32.totalorder %s28, 23
      %p219 = por %p217, %p218
      %p221 = scmp.ne.s32.totalorder %s204, %s220
      %p222 = scmp.eq.s32.totalorder %s28, 0
      %p223 = por %p221, %p222
      %s224 = ssub.s32 %s30, %s37
      %p225 = scmp.eq.s32.totalorder %s224, 0
      %s227 = sadd.s32 %s226, 1
      %s228 = scalar_select %p225, %s226, %s227
      %p231 = pneg %p225
      %p232 = scmp.eq.s32.totalorder %s22, 23
      %p233 = por %p231, %p232
      %p234 = scmp.ne.s32.totalorder %s226, %s229
      %p235 = scmp.eq.s32.totalorder %s22, 0
      %p236 = por %p234, %p235
      %p237 = scmp.ne.s32.totalorder %s226, %s229
      %p238 = scmp.eq.s32.totalorder %s27, 23
      %p239 = por %p237, %p238
      %p240 = scmp.ne.s32.totalorder %s229, %s230
      %p241 = scmp.eq.s32.totalorder %s27, 0
      %p242 = por %p240, %p241
      %p243 = scmp.ne.s32.totalorder %s229, %s230
      %p244 = scmp.eq.s32.totalorder %s28, 23
      %p245 = por %p243, %p244
      %p247 = scmp.ne.s32.totalorder %s230, %s246
      %p248 = scmp.eq.s32.totalorder %s28, 0
      %p249 = por %p247, %p248
      %s250 = ssub.s32 %s30, %s37
      %p251 = scmp.eq.s32.totalorder %s250, 0
      %s253 = sadd.s32 %s252, 1
      %s254 = scalar_select %p251, %s252, %s253
      %p257 = pneg %p251
      %p258 = scmp.eq.s32.totalorder %s22, 23
      %p259 = por %p257, %p258
      %p260 = scmp.ne.s32.totalorder %s252, %s255
      %p261 = scmp.eq.s32.totalorder %s22, 0
      %p262 = por %p260, %p261
      %p263 = scmp.ne.s32.totalorder %s252, %s255
      %p264 = scmp.eq.s32.totalorder %s27, 23
      %p265 = por %p263, %p264
      %p266 = scmp.ne.s32.totalorder %s255, %s256
      %p267 = scmp.eq.s32.totalorder %s27, 0
      %p268 = por %p266, %p267
      %p269 = scmp.ne.s32.totalorder %s255, %s256
      %p270 = scmp.eq.s32.totalorder %s28, 23
      %p271 = por %p269, %p270
      %p273 = scmp.ne.s32.totalorder %s256, %s272
      %p274 = scmp.eq.s32.totalorder %s28, 0
      %p275 = por %p273, %p274
      %s276 = ssub.s32 %s30, %s37
      %p277 = scmp.eq.s32.totalorder %s276, 0
      %s279 = sadd.s32 %s278, 1
      %s280 = scalar_select %p277, %s278, %s279
      %p283 = pneg %p277
      %p284 = scmp.eq.s32.totalorder %s22, 23
      %p285 = por %p283, %p284
      %p286 = scmp.ne.s32.totalorder %s278, %s281
      %p287 = scmp.eq.s32.totalorder %s22, 0
      %p288 = por %p286, %p287
      %p289 = scmp.ne.s32.totalorder %s278, %s281
      %p290 = scmp.eq.s32.totalorder %s27, 23
      %p291 = por %p289, %p290
      %p292 = scmp.ne.s32.totalorder %s281, %s282
      %p293 = scmp.eq.s32.totalorder %s27, 0
      %p294 = por %p292, %p293
      %p295 = scmp.ne.s32.totalorder %s281, %s282
      %p296 = scmp.eq.s32.totalorder %s28, 23
      %p297 = por %p295, %p296
      %p299 = scmp.ne.s32.totalorder %s282, %s298
      %p300 = scmp.eq.s32.totalorder %s28, 0
      %p301 = por %p299, %p300
      %s302 = ssub.s32 %s30, %s37
      %p303 = scmp.eq.s32.totalorder %s302, 0
      %s305 = sadd.s32 %s304, 1
      %s306 = scalar_select %p303, %s304, %s305
      %p309 = pneg %p303
      %p310 = scmp.eq.s32.totalorder %s22, 23
      %p311 = por %p309, %p310
      %p312 = scmp.ne.s32.totalorder %s304, %s307
      %p313 = scmp.eq.s32.totalorder %s22, 0
      %p314 = por %p312, %p313
      %p315 = scmp.ne.s32.totalorder %s304, %s307
      %p316 = scmp.eq.s32.totalorder %s27, 23
      %p317 = por %p315, %p316
      %p318 = scmp.ne.s32.totalorder %s307, %s308
      %p319 = scmp.eq.s32.totalorder %s27, 0
      %p320 = por %p318, %p319
      %p321 = scmp.ne.s32.totalorder %s307, %s308
      %p322 = scmp.eq.s32.totalorder %s28, 23
      %p323 = por %p321, %p322
      %p325 = scmp.ne.s32.totalorder %s308, %s324
      %p326 = scmp.eq.s32.totalorder %s28, 0
      %p327 = por %p325, %p326
      %s328 = ssub.s32 %s30, %s37
      %p329 = scmp.eq.s32.totalorder %s328, 0
      %s331 = sadd.s32 %s330, 1
      %s332 = scalar_select %p329, %s330, %s331
      %p335 = pneg %p329
      %p336 = scmp.eq.s32.totalorder %s22, 23
      %p337 = por %p335, %p336
      %p338 = scmp.ne.s32.totalorder %s330, %s333
      %p339 = scmp.eq.s32.totalorder %s22, 0
      %p340 = por %p338, %p339
      %p341 = scmp.ne.s32.totalorder %s330, %s333
      %p342 = scmp.eq.s32.totalorder %s27, 23
      %p343 = por %p341, %p342
      %p344 = scmp.ne.s32.totalorder %s333, %s334
      %p345 = scmp.eq.s32.totalorder %s27, 0
      %p346 = por %p344, %p345
      %p347 = scmp.ne.s32.totalorder %s333, %s334
      %p348 = scmp.eq.s32.totalorder %s28, 23
      %p349 = por %p347, %p348
      %p351 = scmp.ne.s32.totalorder %s334, %s350
      %p352 = scmp.eq.s32.totalorder %s28, 0
      %p353 = por %p351, %p352
      %s354 = ssub.s32 %s30, %s37
      %p355 = scmp.eq.s32.totalorder %s354, 0
      %s357 = sadd.s32 %s356, 1
      %s358 = scalar_select %p355, %s356, %s357
      %p361 = pneg %p355
      %p362 = scmp.eq.s32.totalorder %s22, 23
      %p363 = por %p361, %p362
      %p364 = scmp.ne.s32.totalorder %s356, %s359
      %p365 = scmp.eq.s32.totalorder %s22, 0
      %p366 = por %p364, %p365
      %p367 = scmp.ne.s32.totalorder %s356, %s359
      %p368 = scmp.eq.s32.totalorder %s27, 23
      %p369 = por %p367, %p368
      %p370 = scmp.ne.s32.totalorder %s359, %s360
      %p371 = scmp.eq.s32.totalorder %s27, 0
      %p372 = por %p370, %p371
      %p373 = scmp.ne.s32.totalorder %s359, %s360
      %p374 = scmp.eq.s32.totalorder %s28, 23
      %p375 = por %p373, %p374
      %p377 = scmp.ne.s32.totalorder %s360, %s376
      %p378 = scmp.eq.s32.totalorder %s28, 0
      %p379 = por %p377, %p378
      %s380 = ssub.s32 %s29, %s41
      %p381 = scmp.eq.s32.totalorder %s380, 0
      %s383 = sadd.s32 %s382, 1
      %s384 = scalar_select %p381, %s382, %s383
      %p387 = pneg %p381
      %p388 = scmp.eq.s32.totalorder %s22, 23
      %p389 = por %p387, %p388
      %p390 = scmp.ne.s32.totalorder %s382, %s385
      %p391 = scmp.eq.s32.totalorder %s22, 0
      %p392 = por %p390, %p391
      %p393 = scmp.ne.s32.totalorder %s382, %s385
      %p394 = scmp.eq.s32.totalorder %s27, 23
      %p395 = por %p393, %p394
      %p396 = scmp.ne.s32.totalorder %s385, %s386
      %p397 = scmp.eq.s32.totalorder %s27, 0
      %p398 = por %p396, %p397
      %p399 = scmp.ne.s32.totalorder %s385, %s386
      %p400 = scmp.eq.s32.totalorder %s28, 23
      %p401 = por %p399, %p400
      %p403 = scmp.ne.s32.totalorder %s386, %s402
      %p404 = scmp.eq.s32.totalorder %s28, 0
      %p405 = por %p403, %p404
      %p406 = scmp.le.s32.totalorder 1, %s22
      %p407 = scmp.lt.s32.totalorder %s22, 25
      %p408 = pnand %p406, %p407
      %p409 = pneg %p408
      // Predicated region
      $region9: #{tpu_custom_call.1} parent=5 // pred_check
        _
      $region10: #{tpu_custom_call.1} parent=5 // pred_check_branch
        %411 = sbr.rel (%p408) target = $region12
      $region11: #{tpu_custom_call.1} parent=5 // pred_region
        %s412 = ssub.s32 %s22, 1
      $region12: #{tpu_custom_call.1} parent=5 // pred_fallthru
        _
      %p413 = scmp.lt.s32.totalorder %s22, 24
      // Predicated region
      $region13: #{tpu_custom_call.1} parent=5 // pred_check
        %p414 = pneg %p413
      $region14: #{tpu_custom_call.1} parent=5 // pred_check_branch
        %416 = sbr.rel (%p414) target = $region16
      $region15: #{tpu_custom_call.1} parent=5 // pred_region
        // Predicated region
        $region17: #{tpu_custom_call.1} parent=15 // pred_check
          %p417 = pneg %p54
        $region18: #{tpu_custom_call.1} parent=15 // pred_check_branch
          %419 = sbr.rel (%p417) target = $region20
        $region19: #{tpu_custom_call.1} parent=15 // pred_region
          %p420 = scmp.lt.s32.totalorder %s29, 1
          %s421 = scalar_select %p420, %s29, 1
          %s422 = smul.addr %s421, 8
          %s423 = scalar_lea.vmem %s0, %s422
        $region20: #{tpu_custom_call.1} parent=15 // pred_fallthru
          _
        // Predicated region
        $region21: #{tpu_custom_call.1} parent=15 // pred_check
          %p424 = pneg %p80
        $region22: #{tpu_custom_call.1} parent=15 // pred_check_branch
          %426 = sbr.rel (%p424) target = $region24
        $region23: #{tpu_custom_call.1} parent=15 // pred_region
          %p427 = scmp.lt.s32.totalorder %s30, 11
          %s428 = scalar_select %p427, %s30, 11
          %s429 = scalar_lea.vmem %s1, %s428
        $region24: #{tpu_custom_call.1} parent=15 // pred_fallthru
          _
        // Predicated region
        $region25: #{tpu_custom_call.1} parent=15 // pred_check
          %p430 = pneg %p106
        $region26: #{tpu_custom_call.1} parent=15 // pred_check_branch
          %432 = sbr.rel (%p430) target = $region28
        $region27: #{tpu_custom_call.1} parent=15 // pred_region
          %p433 = scmp.lt.s32.totalorder %s30, 11
          %s434 = scalar_select %p433, %s30, 11
          %s435 = scalar_lea.vmem %s2, %s434
        $region28: #{tpu_custom_call.1} parent=15 // pred_fallthru
          _
        // Predicated region
        $region29: #{tpu_custom_call.1} parent=15 // pred_check
          %p436 = pneg %p132
        $region30: #{tpu_custom_call.1} parent=15 // pred_check_branch
          %438 = sbr.rel (%p436) target = $region32
        $region31: #{tpu_custom_call.1} parent=15 // pred_region
          %p439 = scmp.lt.s32.totalorder %s30, 11
          %s440 = scalar_select %p439, %s30, 11
          %s441 = smul.addr %s440, 4
          %s442 = smul.addr %s441, 4
          %s443 = scalar_lea.vmem %s3, %s442
        $region32: #{tpu_custom_call.1} parent=15 // pred_fallthru
          _
        // Predicated region
        $region33: #{tpu_custom_call.1} parent=15 // pred_check
          %p444 = pneg %p158
        $region34: #{tpu_custom_call.1} parent=15 // pred_check_branch
          %446 = sbr.rel (%p444) target = $region36
        $region35: #{tpu_custom_call.1} parent=15 // pred_region
          %p447 = scmp.lt.s32.totalorder %s30, 11
          %s448 = scalar_select %p447, %s30, 11
          %s449 = scalar_lea.vmem %s4, %s448
        $region36: #{tpu_custom_call.1} parent=15 // pred_fallthru
          _
        // Predicated region
        $region37: #{tpu_custom_call.1} parent=15 // pred_check
          %p450 = pneg %p184
        $region38: #{tpu_custom_call.1} parent=15 // pred_check_branch
          %452 = sbr.rel (%p450) target = $region40
        $region39: #{tpu_custom_call.1} parent=15 // pred_region
          %p453 = scmp.lt.s32.totalorder %s30, 11
          %s454 = scalar_select %p453, %s30, 11
          %s455 = smul.addr %s454, 4
          %s456 = smul.addr %s455, 4
          %s457 = scalar_lea.vmem %s5, %s456
        $region40: #{tpu_custom_call.1} parent=15 // pred_fallthru
          _
        // Predicated region
        $region41: #{tpu_custom_call.1} parent=15 // pred_check
          %p458 = pneg %p210
        $region42: #{tpu_custom_call.1} parent=15 // pred_check_branch
          %460 = sbr.rel (%p458) target = $region44
        $region43: #{tpu_custom_call.1} parent=15 // pred_region
          %p461 = scmp.lt.s32.totalorder %s30, 11
          %s462 = scalar_select %p461, %s30, 11
          %s463 = scalar_lea.vmem %s6, %s462
        $region44: #{tpu_custom_call.1} parent=15 // pred_fallthru
          _
        // Predicated region
        $region45: #{tpu_custom_call.1} parent=15 // pred_check
          %p464 = pneg %p236
        $region46: #{tpu_custom_call.1} parent=15 // pred_check_branch
          %466 = sbr.rel (%p464) target = $region48
        $region47: #{tpu_custom_call.1} parent=15 // pred_region
          %p467 = scmp.lt.s32.totalorder %s30, 11
          %s468 = scalar_select %p467, %s30, 11
          %s469 = scalar_lea.vmem %s7, %s468
        $region48: #{tpu_custom_call.1} parent=15 // pred_fallthru
          _
        // Predicated region
        $region49: #{tpu_custom_call.1} parent=15 // pred_check
          %p470 = pneg %p262
        $region50: #{tpu_custom_call.1} parent=15 // pred_check_branch
          %472 = sbr.rel (%p470) target = $region52
        $region51: #{tpu_custom_call.1} parent=15 // pred_region
          %p473 = scmp.lt.s32.totalorder %s30, 11
          %s474 = scalar_select %p473, %s30, 11
          %s475 = scalar_lea.vmem %s8, %s474
        $region52: #{tpu_custom_call.1} parent=15 // pred_fallthru
          _
        // Predicated region
        $region53: #{tpu_custom_call.1} parent=15 // pred_check
          %p476 = pneg %p288
        $region54: #{tpu_custom_call.1} parent=15 // pred_check_branch
          %478 = sbr.rel (%p476) target = $region56
        $region55: #{tpu_custom_call.1} parent=15 // pred_region
          %p479 = scmp.lt.s32.totalorder %s30, 11
          %s480 = scalar_select %p479, %s30, 11
          %s481 = smul.addr %s480, 4
          %s482 = smul.addr %s481, 4
          %s483 = scalar_lea.vmem %s9, %s482
        $region56: #{tpu_custom_call.1} parent=15 // pred_fallthru
          _
        // Predicated region
        $region57: #{tpu_custom_call.1} parent=15 // pred_check
          %p484 = pneg %p314
        $region58: #{tpu_custom_call.1} parent=15 // pred_check_branch
          %486 = sbr.rel (%p484) target = $region60
        $region59: #{tpu_custom_call.1} parent=15 // pred_region
          %p487 = scmp.lt.s32.totalorder %s30, 11
          %s488 = scalar_select %p487, %s30, 11
          %s489 = scalar_lea.vmem %s10, %s488
        $region60: #{tpu_custom_call.1} parent=15 // pred_fallthru
          _
        // Predicated region
        $region61: #{tpu_custom_call.1} parent=15 // pred_check
          %p490 = pneg %p340
        $region62: #{tpu_custom_call.1} parent=15 // pred_check_branch
          %492 = sbr.rel (%p490) target = $region64
        $region63: #{tpu_custom_call.1} parent=15 // pred_region
          %p493 = scmp.lt.s32.totalorder %s30, 11
          %s494 = scalar_select %p493, %s30, 11
          %s495 = smul.addr %s494, 16
          %s496 = smul.addr %s495, 4
          %s497 = scalar_lea.vmem %s11, %s496
        $region64: #{tpu_custom_call.1} parent=15 // pred_fallthru
          _
        // Predicated region
        $region65: #{tpu_custom_call.1} parent=15 // pred_check
          %p498 = pneg %p366
        $region66: #{tpu_custom_call.1} parent=15 // pred_check_branch
          %500 = sbr.rel (%p498) target = $region68
        $region67: #{tpu_custom_call.1} parent=15 // pred_region
          %p501 = scmp.lt.s32.totalorder %s30, 11
          %s502 = scalar_select %p501, %s30, 11
          %s503 = scalar_lea.vmem %s12, %s502
        $region68: #{tpu_custom_call.1} parent=15 // pred_fallthru
          _
      $region16: #{tpu_custom_call.1} parent=5 // pred_fallthru
        _
      %p504 = scmp.le.s32.totalorder 1, %s22
      %p505 = scmp.lt.s32.totalorder %s22, 25
      %p506 = pnand %p504, %p505
      %p507 = pneg %p506
      // Predicated region
      $region69: #{tpu_custom_call.1} parent=5 // pred_check
        _
      $region70: #{tpu_custom_call.1} parent=5 // pred_check_branch
        %509 = sbr.rel (%p506) target = $region72
      $region71: #{tpu_custom_call.1} parent=5 // pred_region
        %s510 = ssub.s32 %s22, 1
        %p511 = scmp.lt.s32.totalorder %s31, 1
        %s512 = scalar_select %p511, %s31, 1
        %s513 = smul.addr %s512, 8
        %s514 = scalar_lea.vmem %s0, %s513
        %p515 = pneg %p60
        %p516 = pneg %p57
        %p517 = scmp.lt.s32.totalorder %s32, 11
        %s518 = scalar_select %p517, %s32, 11
        %s519 = scalar_lea.vmem %s1, %s518
        %p520 = pneg %p86
        %p521 = pneg %p83
        %p522 = scmp.lt.s32.totalorder %s32, 11
        %s523 = scalar_select %p522, %s32, 11
        %s524 = scalar_lea.vmem %s2, %s523
        %p525 = pneg %p112
        %p526 = pneg %p109
        %p527 = scmp.lt.s32.totalorder %s32, 11
        %s528 = scalar_select %p527, %s32, 11
        %s529 = smul.addr %s528, 4
        %s530 = smul.addr %s529, 4
        %s531 = scalar_lea.vmem %s3, %s530
        %p532 = pneg %p138
        %p533 = pneg %p135
        %p534 = scmp.lt.s32.totalorder %s32, 11
        %s535 = scalar_select %p534, %s32, 11
        %s536 = scalar_lea.vmem %s4, %s535
        %p537 = pneg %p164
        %p538 = pneg %p161
        %p539 = scmp.lt.s32.totalorder %s32, 11
        %s540 = scalar_select %p539, %s32, 11
        %s541 = smul.addr %s540, 4
        %s542 = smul.addr %s541, 4
        %s543 = scalar_lea.vmem %s5, %s542
        %p544 = pneg %p190
        %p545 = pneg %p187
        %p546 = scmp.lt.s32.totalorder %s32, 11
        %s547 = scalar_select %p546, %s32, 11
        %s548 = scalar_lea.vmem %s6, %s547
        %p549 = pneg %p216
        %p550 = pneg %p213
        %p551 = scmp.lt.s32.totalorder %s32, 11
        %s552 = scalar_select %p551, %s32, 11
        %s553 = scalar_lea.vmem %s7, %s552
        %p554 = pneg %p242
        %p555 = pneg %p239
        %p556 = scmp.lt.s32.totalorder %s32, 11
        %s557 = scalar_select %p556, %s32, 11
        %s558 = scalar_lea.vmem %s8, %s557
        %p559 = pneg %p268
        %p560 = pneg %p265
        %p561 = scmp.lt.s32.totalorder %s32, 11
        %s562 = scalar_select %p561, %s32, 11
        %s563 = smul.addr %s562, 4
        %s564 = smul.addr %s563, 4
        %s565 = scalar_lea.vmem %s9, %s564
        %p566 = pneg %p294
        %p567 = pneg %p291
        %p568 = scmp.lt.s32.totalorder %s32, 11
        %s569 = scalar_select %p568, %s32, 11
        %s570 = scalar_lea.vmem %s10, %s569
        %p571 = pneg %p320
        %p572 = pneg %p317
        %p573 = scmp.lt.s32.totalorder %s32, 11
        %s574 = scalar_select %p573, %s32, 11
        %s575 = smul.addr %s574, 16
        %s576 = smul.addr %s575, 4
        %s577 = scalar_lea.vmem %s11, %s576
        %p578 = pneg %p346
        %p579 = pneg %p343
        %p580 = scmp.lt.s32.totalorder %s32, 11
        %s581 = scalar_select %p580, %s32, 11
        %s582 = scalar_lea.vmem %s12, %s581
        %p583 = pneg %p372
        %p584 = pneg %p369
        %p585 = pneg %p398
        %p586 = pneg %p395
        %s587 = sand.u32 %s385, 1
        %s588 = scalar_lea.sflag [#allocation4], %s587
        %s589 = sand.u32 %s385, 1
        %s590 = smul.addr %s589, 8
        %s591 = scalar_lea.vmem [#allocation3], %s590
        %p592 = scmp.lt.s32.totalorder %s31, 1
        %s593 = scalar_select %p592, %s31, 1
        %s594 = smul.addr %s593, 8
        %s595 = scalar_lea.vmem %s0, %s594
        %p596 = scmp.lt.s32.totalorder %s32, 11
        %s597 = scalar_select %p596, %s32, 11
        %s598 = scalar_lea.vmem %s1, %s597
        %p599 = scmp.lt.s32.totalorder %s32, 11
        %s600 = scalar_select %p599, %s32, 11
        %s601 = scalar_lea.vmem %s2, %s600
        %p602 = scmp.lt.s32.totalorder %s32, 11
        %s603 = scalar_select %p602, %s32, 11
        %s604 = smul.addr %s603, 4
        %s605 = smul.addr %s604, 4
        %s606 = scalar_lea.vmem %s3, %s605
        %p607 = scmp.lt.s32.totalorder %s32, 11
        %s608 = scalar_select %p607, %s32, 11
        %s609 = scalar_lea.vmem %s4, %s608
        %p610 = scmp.lt.s32.totalorder %s32, 11
        %s611 = scalar_select %p610, %s32, 11
        %s612 = smul.addr %s611, 4
        %s613 = smul.addr %s612, 4
        %s614 = scalar_lea.vmem %s5, %s613
        %p615 = scmp.lt.s32.totalorder %s32, 11
        %s616 = scalar_select %p615, %s32, 11
        %s617 = scalar_lea.vmem %s6, %s616
        %p618 = scmp.lt.s32.totalorder %s32, 11
        %s619 = scalar_select %p618, %s32, 11
        %s620 = scalar_lea.vmem %s7, %s619
        %p621 = scmp.lt.s32.totalorder %s32, 11
        %s622 = scalar_select %p621, %s32, 11
        %s623 = scalar_lea.vmem %s8, %s622
        %p624 = scmp.lt.s32.totalorder %s32, 11
        %s625 = scalar_select %p624, %s32, 11
        %s626 = smul.addr %s625, 4
        %s627 = smul.addr %s626, 4
        %s628 = scalar_lea.vmem %s9, %s627
        %p629 = scmp.lt.s32.totalorder %s32, 11
        %s630 = scalar_select %p629, %s32, 11
        %s631 = scalar_lea.vmem %s10, %s630
        %p632 = scmp.lt.s32.totalorder %s32, 11
        %s633 = scalar_select %p632, %s32, 11
        %s634 = smul.addr %s633, 16
        %s635 = smul.addr %s634, 4
        %s636 = scalar_lea.vmem %s11, %s635
        %p637 = scmp.lt.s32.totalorder %s32, 11
        %s638 = scalar_select %p637, %s32, 11
        %s639 = scalar_lea.vmem %s12, %s638
        %p641 = scmp.eq.s32.totalorder %s32, 0
        // Predicated region
        $region73: #{tpu_custom_call.1} parent=71 // pred_check
          %p642 = pneg %p641
        $region74: #{tpu_custom_call.1} parent=71 // pred_check_branch
          %644 = sbr.rel (%p642) target = $region76
        $region75: #{tpu_custom_call.1} parent=71 // pred_region
          %v645 = vld [vmem:[%s595] sm:$0xff]
          %vm646 = vcmask 261120
          %647 = vst.msk [vmem:[#allocation2] sm:$0xff] %vm646, %v645
        $region76: #{tpu_custom_call.1} parent=71 // pred_fallthru
          _
        %v648 = vld [vmem:[#allocation2] sm:$0xff]
        %v649 = vld [vmem:[%s598] sm:$0x1]
        %v650 = vld [vmem:[%s601] sm:$0x1]
        %vm651 = vcmask 261120
        %v652 = vsel %vm651, %v648, 0.0
        %653 = vadd.xlane.f32.xlu0 %v652
        %v654 = vpop.xlane.xlu0 %653
        %v655 = vrcp.pop 32.0
        %v656 = vmul.f32 32.0, %v655
        %v657 = vsub.f32 1.0, %v656
        %v658 = vmul.f32 %v655, %v657
        %v659 = vadd.f32 %v655, %v658
        %vm660 = vweird.f32 %v655
        %v661 = vsel %vm660, %v655, %v659
        %v662 = vmul.f32 %v654, %v661
        %v663 = vsub.f32 %v648, %v662
        %v664 = vmul.f32 %v663, %v663
        %v665 = vsel %vm651, %v664, 0.0
        %666 = vadd.xlane.f32.xlu0 %v665
        %v667 = vpop.xlane.xlu0 %666
        %v668 = vmul.f32 %v667, %v661
        %v669 = vadd.f32 %v668, 1e-05
        %v670 = vrsqrt.pop %v669
        %v671 = vmul.f32 %v670, %v669
        %v672 = vmul.f32 %v671, %v670
        %v673 = vmul.f32 0.5, %v672
        %v674 = vsub.f32 1.5, %v673
        %v675 = vmul.f32 %v670, %v674
        %vm676 = vweird.f32 %v669
        %vm677 = vweird.f32 %v670
        %vm678 = vmor %vm676, %vm677
        %v679 = vsel %vm678, %v670, %v675
        %v680 = vmul.f32 %v663, %v679
        %v682 = vperm.slane %v649, 0
        %v684 = vmul.f32 %v680, %v682
        %v686 = vperm.slane %v650, 0
        %v688 = vadd.f32 %v684, %v686
        %v689 = vpack.c.bf16 %v688, %v688
        %v690 = vld [vmem:[%s606] sm:$0xf]
        %v691 = vld [vmem:[%s606 + $0x4] sm:$0xf]
        %v692 = vld [vmem:[%s606 + $0x8] sm:$0xf]
        %v693 = vld [vmem:[%s606 + $0xc] sm:$0xf]
        %v694 = vld [vmem:[%s609] sm:$0x1]
        %v696 = vperm.slane %v694, 0
        %v702 = vunpack.c.l.b16 %v690
        %v703 = vunpack.c.l.b16 %v691
        %v704 = vunpack.c.l.b16 %v692
        %v705 = vunpack.c.l.b16 %v693
        %v706 = vpack.c.b16 %v703, %v702
        %v707 = vpack.c.b16 %v705, %v704
        %v711 = vsel %vm651, %v689, 0
        %713 = vmatpush.bf16.msra.mxu0 0
        %714 = vmatpush.bf16.msra.mxu0 0
        %715 = vmatpush.bf16.msra.mxu0 0
        %716 = vmatpush.bf16.msra.mxu0 0
        %717 = vmatpush.bf16.msra.mxu0 0
        %718 = vmatpush.bf16.msra.mxu0 0
        %719 = vmatpush.bf16.msra.mxu0 %v707
        %720 = vmatpush.bf16.msra.mxu0 %v706
        %721 = vmatmul.bf16.gmra.mxu0 %v711
        %v722 = vpop.f32.mrf.mxu0
        %v723 = vadd.f32 %v696, %v722
        %v724 = vpop.f32.mrf.mxu0
        %725 = vdwg.mxu0
        %727 = vrot.lane.b32.xlu0 %v723, 120
        %v728 = vpop.permute.xlu0 %727
        %730 = vrot.lane.b32.xlu0 %v723, 112
        %v731 = vpop.permute.xlu0 %730
        %733 = vrot.lane.b32.xlu0 %v723, 104
        %v734 = vpop.permute.xlu0 %733
        %v736 = vrot.slane %v731, 4
        %vm737 = vcmask 1047556
        %v738 = vsel %vm737, %v736, %v723
        %v739 = vrot.slane %v723, 4
        %v740 = vsel %vm737, %v731, %v739
        %v742 = vunpack.c.l.s4 1983009808
        %v743 = vunpack.c.0.s8 %v742
        %v744 = vperm.slane %v738, %v743
        %v746 = vunpack.c.l.s4 1983009808
        %v747 = vunpack.c.0.s8 %v746
        %v748 = vperm.slane %v740, %v747
        %v749 = vrot.slane %v734, 4
        %v750 = vsel %vm737, %v749, %v728
        %v751 = vrot.slane %v728, 4
        %v752 = vsel %vm737, %v734, %v751
        %v754 = vunpack.c.l.s4 1983009808
        %v755 = vunpack.c.0.s8 %v754
        %v756 = vperm.slane %v750, %v755
        %v758 = vunpack.c.l.s4 1983009808
        %v759 = vunpack.c.0.s8 %v758
        %v760 = vperm.slane %v752, %v759
        %v761 = vrot.slane %v756, 4
        %v762 = vsel %vm737, %v761, %v744
        %v763 = vrot.slane %v744, 4
        %v764 = vsel %vm737, %v756, %v763
        %v766 = vunpack.c.l.s4 1934713408
        %v767 = vunpack.c.0.s8 %v766
        %v768 = vperm.slane %v762, %v767
        %v770 = vunpack.c.l.s4 1934713408
        %v771 = vunpack.c.0.s8 %v770
        %v772 = vperm.slane %v764, %v771
        %v773 = vrot.slane %v760, 4
        %v774 = vsel %vm737, %v773, %v748
        %v775 = vrot.slane %v748, 4
        %v776 = vsel %vm737, %v760, %v775
        %v778 = vunpack.c.l.s4 1934713408
        %v779 = vunpack.c.0.s8 %v778
        %v780 = vperm.slane %v774, %v779
        %v782 = vunpack.c.l.s4 1934713408
        %v783 = vunpack.c.0.s8 %v782
        %v784 = vperm.slane %v776, %v783
        %v785 = vrot.slane %v768, 4
        %v786 = vsel %vm737, 0.0, %v785
        %v787 = vrot.slane %v772, 4
        %v788 = vsel %vm737, 0.0, %v787
        %v789 = vrot.slane %v780, 4
        %v790 = vsel %vm737, 0.0, %v789
        %v791 = vrot.slane %v784, 4
        %v792 = vsel %vm737, 0.0, %v791
        %v793 = vsel %vm737, %v787, %v768
        %v795 = vunpack.c.l.s4 1983009808
        %v796 = vunpack.c.0.s8 %v795
        %v797 = vperm.slane %v793, %v796
        %v798 = vrot.slane %v788, 4
        %v799 = vsel %vm737, %v798, %v786
        %v801 = vunpack.c.l.s4 1983009808
        %v802 = vunpack.c.0.s8 %v801
        %v803 = vperm.slane %v799, %v802
        %v804 = vsel %vm737, %v791, %v780
        %v806 = vunpack.c.l.s4 1983009808
        %v807 = vunpack.c.0.s8 %v806
        %v808 = vperm.slane %v804, %v807
        %v809 = vrot.slane %v792, 4
        %v810 = vsel %vm737, %v809, %v790
        %v812 = vunpack.c.l.s4 1983009808
        %v813 = vunpack.c.0.s8 %v812
        %v814 = vperm.slane %v810, %v813
        %v815 = vrot.slane %v803, 4
        %v816 = vsel %vm737, %v815, %v797
        %v817 = vrot.slane %v797, 4
        %v818 = vsel %vm737, %v803, %v817
        %v820 = vunpack.c.l.s4 1934713408
        %v821 = vunpack.c.0.s8 %v820
        %v822 = vperm.slane %v816, %v821
        %v824 = vunpack.c.l.s4 1934713408
        %v825 = vunpack.c.0.s8 %v824
        %v826 = vperm.slane %v818, %v825
        %v827 = vrot.slane %v814, 4
        %v828 = vsel %vm737, %v827, %v808
        %v829 = vrot.slane %v808, 4
        %v830 = vsel %vm737, %v814, %v829
        %v832 = vunpack.c.l.s4 1934713408
        %v833 = vunpack.c.0.s8 %v832
        %v834 = vperm.slane %v828, %v833
        %v836 = vunpack.c.l.s4 1934713408
        %v837 = vunpack.c.0.s8 %v836
        %v838 = vperm.slane %v830, %v837
        %v839 = vrot.slane %v834, 4
        %v840 = vsel %vm737, %v839, %v822
        %v841 = vrot.slane %v822, 4
        %v842 = vsel %vm737, %v834, %v841
        %v843 = vrot.slane %v838, 4
        %v844 = vsel %vm737, %v843, %v826
        %v845 = vrot.slane %v826, 4
        %v846 = vsel %vm737, %v838, %v845
        %847 = vrot.lane.b32.xlu0 %v723, 96
        %v848 = vpop.permute.xlu0 %847
        %849 = vrot.lane.b32.xlu0 %v728, 96
        %v850 = vpop.permute.xlu0 %849
        %851 = vrot.lane.b32.xlu0 %v731, 96
        %v852 = vpop.permute.xlu0 %851
        %853 = vrot.lane.b32.xlu0 %v734, 96
        %v854 = vpop.permute.xlu0 %853
        %v859 = vrot.slane %v852, 4
        %v860 = vsel %vm737, %v859, %v848
        %v861 = vrot.slane %v848, 4
        %v862 = vsel %vm737, %v852, %v861
        %v864 = vunpack.c.l.s4 1983009808
        %v865 = vunpack.c.0.s8 %v864
        %v866 = vperm.slane %v860, %v865
        %v868 = vunpack.c.l.s4 1983009808
        %v869 = vunpack.c.0.s8 %v868
        %v870 = vperm.slane %v862, %v869
        %v871 = vrot.slane %v854, 4
        %v872 = vsel %vm737, %v871, %v850
        %v873 = vrot.slane %v850, 4
        %v874 = vsel %vm737, %v854, %v873
        %v876 = vunpack.c.l.s4 1983009808
        %v877 = vunpack.c.0.s8 %v876
        %v878 = vperm.slane %v872, %v877
        %v880 = vunpack.c.l.s4 1983009808
        %v881 = vunpack.c.0.s8 %v880
        %v882 = vperm.slane %v874, %v881
        %v883 = vrot.slane %v878, 4
        %v884 = vsel %vm737, %v883, %v866
        %v885 = vrot.slane %v866, 4
        %v886 = vsel %vm737, %v878, %v885
        %v888 = vunpack.c.l.s4 1934713408
        %v889 = vunpack.c.0.s8 %v888
        %v890 = vperm.slane %v884, %v889
        %v892 = vunpack.c.l.s4 1934713408
        %v893 = vunpack.c.0.s8 %v892
        %v894 = vperm.slane %v886, %v893
        %v895 = vrot.slane %v882, 4
        %v896 = vsel %vm737, %v895, %v870
        %v897 = vrot.slane %v870, 4
        %v898 = vsel %vm737, %v882, %v897
        %v900 = vunpack.c.l.s4 1934713408
        %v901 = vunpack.c.0.s8 %v900
        %v902 = vperm.slane %v896, %v901
        %v904 = vunpack.c.l.s4 1934713408
        %v905 = vunpack.c.0.s8 %v904
        %v906 = vperm.slane %v898, %v905
        %v907 = vrot.slane %v890, 4
        %v908 = vsel %vm737, 0.0, %v907
        %v909 = vrot.slane %v894, 4
        %v910 = vsel %vm737, 0.0, %v909
        %v911 = vrot.slane %v902, 4
        %v912 = vsel %vm737, 0.0, %v911
        %v913 = vrot.slane %v906, 4
        %v914 = vsel %vm737, 0.0, %v913
        %v915 = vsel %vm737, %v909, %v890
        %v917 = vunpack.c.l.s4 1983009808
        %v918 = vunpack.c.0.s8 %v917
        %v919 = vperm.slane %v915, %v918
        %v920 = vrot.slane %v910, 4
        %v921 = vsel %vm737, %v920, %v908
        %v923 = vunpack.c.l.s4 1983009808
        %v924 = vunpack.c.0.s8 %v923
        %v925 = vperm.slane %v921, %v924
        %v926 = vsel %vm737, %v913, %v902
        %v928 = vunpack.c.l.s4 1983009808
        %v929 = vunpack.c.0.s8 %v928
        %v930 = vperm.slane %v926, %v929
        %v931 = vrot.slane %v914, 4
        %v932 = vsel %vm737, %v931, %v912
        %v934 = vunpack.c.l.s4 1983009808
        %v935 = vunpack.c.0.s8 %v934
        %v936 = vperm.slane %v932, %v935
        %v937 = vrot.slane %v925, 4
        %v938 = vsel %vm737, %v937, %v919
        %v939 = vrot.slane %v919, 4
        %v940 = vsel %vm737, %v925, %v939
        %v942 = vunpack.c.l.s4 1934713408
        %v943 = vunpack.c.0.s8 %v942
        %v944 = vperm.slane %v938, %v943
        %v946 = vunpack.c.l.s4 1934713408
        %v947 = vunpack.c.0.s8 %v946
        %v948 = vperm.slane %v940, %v947
        %v949 = vrot.slane %v936, 4
        %v950 = vsel %vm737, %v949, %v930
        %v951 = vrot.slane %v930, 4
        %v952 = vsel %vm737, %v936, %v951
        %v954 = vunpack.c.l.s4 1934713408
        %v955 = vunpack.c.0.s8 %v954
        %v956 = vperm.slane %v950, %v955
        %v958 = vunpack.c.l.s4 1934713408
        %v959 = vunpack.c.0.s8 %v958
        %v960 = vperm.slane %v952, %v959
        %v961 = vrot.slane %v956, 4
        %v962 = vsel %vm737, %v961, %v944
        %v963 = vrot.slane %v944, 4
        %v964 = vsel %vm737, %v956, %v963
        %v965 = vrot.slane %v960, 4
        %v966 = vsel %vm737, %v965, %v948
        %v967 = vrot.slane %v948, 4
        %v968 = vsel %vm737, %v960, %v967
        %969 = vrot.lane.b32.xlu0 %v723, 64
        %v970 = vpop.permute.xlu0 %969
        %971 = vrot.lane.b32.xlu0 %v728, 64
        %v972 = vpop.permute.xlu0 %971
        %973 = vrot.lane.b32.xlu0 %v731, 64
        %v974 = vpop.permute.xlu0 %973
        %975 = vrot.lane.b32.xlu0 %v734, 64
        %v976 = vpop.permute.xlu0 %975
        %v981 = vrot.slane %v974, 4
        %v982 = vsel %vm737, %v981, %v970
        %v983 = vrot.slane %v970, 4
        %v984 = vsel %vm737, %v974, %v983
        %v986 = vunpack.c.l.s4 1983009808
        %v987 = vunpack.c.0.s8 %v986
        %v988 = vperm.slane %v982, %v987
        %v990 = vunpack.c.l.s4 1983009808
        %v991 = vunpack.c.0.s8 %v990
        %v992 = vperm.slane %v984, %v991
        %v993 = vrot.slane %v976, 4
        %v994 = vsel %vm737, %v993, %v972
        %v995 = vrot.slane %v972, 4
        %v996 = vsel %vm737, %v976, %v995
        %v998 = vunpack.c.l.s4 1983009808
        %v999 = vunpack.c.0.s8 %v998
        %v1000 = vperm.slane %v994, %v999
        %v1002 = vunpack.c.l.s4 1983009808
        %v1003 = vunpack.c.0.s8 %v1002
        %v1004 = vperm.slane %v996, %v1003
        %v1005 = vrot.slane %v1000, 4
        %v1006 = vsel %vm737, %v1005, %v988
        %v1007 = vrot.slane %v988, 4
        %v1008 = vsel %vm737, %v1000, %v1007
        %v1010 = vunpack.c.l.s4 1934713408
        %v1011 = vunpack.c.0.s8 %v1010
        %v1012 = vperm.slane %v1006, %v1011
        %v1014 = vunpack.c.l.s4 1934713408
        %v1015 = vunpack.c.0.s8 %v1014
        %v1016 = vperm.slane %v1008, %v1015
        %v1017 = vrot.slane %v1004, 4
        %v1018 = vsel %vm737, %v1017, %v992
        %v1019 = vrot.slane %v992, 4
        %v1020 = vsel %vm737, %v1004, %v1019
        %v1022 = vunpack.c.l.s4 1934713408
        %v1023 = vunpack.c.0.s8 %v1022
        %v1024 = vperm.slane %v1018, %v1023
        %v1026 = vunpack.c.l.s4 1934713408
        %v1027 = vunpack.c.0.s8 %v1026
        %v1028 = vperm.slane %v1020, %v1027
        %v1029 = vrot.slane %v1012, 4
        %v1030 = vsel %vm737, 0.0, %v1029
        %v1031 = vrot.slane %v1016, 4
        %v1032 = vsel %vm737, 0.0, %v1031
        %v1033 = vrot.slane %v1024, 4
        %v1034 = vsel %vm737, 0.0, %v1033
        %v1035 = vrot.slane %v1028, 4
        %v1036 = vsel %vm737, 0.0, %v1035
        %v1037 = vsel %vm737, %v1031, %v1012
        %v1039 = vunpack.c.l.s4 1983009808
        %v1040 = vunpack.c.0.s8 %v1039
        %v1041 = vperm.slane %v1037, %v1040
        %v1042 = vrot.slane %v1032, 4
        %v1043 = vsel %vm737, %v1042, %v1030
        %v1045 = vunpack.c.l.s4 1983009808
        %v1046 = vunpack.c.0.s8 %v1045
        %v1047 = vperm.slane %v1043, %v1046
        %v1048 = vsel %vm737, %v1035, %v1024
        %v1050 = vunpack.c.l.s4 1983009808
        %v1051 = vunpack.c.0.s8 %v1050
        %v1052 = vperm.slane %v1048, %v1051
        %v1053 = vrot.slane %v1036, 4
        %v1054 = vsel %vm737, %v1053, %v1034
        %v1056 = vunpack.c.l.s4 1983009808
        %v1057 = vunpack.c.0.s8 %v1056
        %v1058 = vperm.slane %v1054, %v1057
        %v1059 = vrot.slane %v1047, 4
        %v1060 = vsel %vm737, %v1059, %v1041
        %v1061 = vrot.slane %v1041, 4
        %v1062 = vsel %vm737, %v1047, %v1061
        %v1064 = vunpack.c.l.s4 1934713408
        %v1065 = vunpack.c.0.s8 %v1064
        %v1066 = vperm.slane %v1060, %v1065
        %v1068 = vunpack.c.l.s4 1934713408
        %v1069 = vunpack.c.0.s8 %v1068
        %v1070 = vperm.slane %v1062, %v1069
        %v1071 = vrot.slane %v1058, 4
        %v1072 = vsel %vm737, %v1071, %v1052
        %v1073 = vrot.slane %v1052, 4
        %v1074 = vsel %vm737, %v1058, %v1073
        %v1076 = vunpack.c.l.s4 1934713408
        %v1077 = vunpack.c.0.s8 %v1076
        %v1078 = vperm.slane %v1072, %v1077
        %v1080 = vunpack.c.l.s4 1934713408
        %v1081 = vunpack.c.0.s8 %v1080
        %v1082 = vperm.slane %v1074, %v1081
        %v1083 = vrot.slane %v1078, 4
        %v1084 = vsel %vm737, %v1083, %v1066
        %v1085 = vrot.slane %v1066, 4
        %v1086 = vsel %vm737, %v1078, %v1085
        %v1087 = vrot.slane %v1082, 4
        %v1088 = vsel %vm737, %v1087, %v1070
        %v1089 = vrot.slane %v1070, 4
        %v1090 = vsel %vm737, %v1082, %v1089
        %v1091 = vpack.c.bf16 %v840, %v840
        %v1092 = vpack.c.bf16 %v842, %v842
        %v1093 = vpack.c.bf16 %v844, %v844
        %v1094 = vpack.c.bf16 %v846, %v846
        %v1095 = vpack.c.bf16 %v962, %v962
        %v1096 = vpack.c.bf16 %v964, %v964
        %v1097 = vpack.c.bf16 %v966, %v966
        %v1098 = vpack.c.bf16 %v968, %v968
        %vm1099 = vcmask 64512
        %v1101 = vsel %vm1099, %v1091, 0
        %v1104 = vsel %vm1099, %v1095, 0
        %1106 = vmatpush.bf16.xpose.msra.mxu0 0
        %1107 = vmatpush.bf16.xpose.msra.mxu0 0
        %1108 = vmatpush.bf16.xpose.msra.mxu0 0
        %1109 = vmatpush.bf16.xpose.msra.mxu0 0
        %1110 = vmatpush.bf16.xpose.msra.mxu0 0
        %1111 = vmatpush.bf16.xpose.msra.mxu0 0
        %1112 = vmatpush.bf16.xpose.msra.mxu0 0
        %1113 = vmatpush.bf16.xpose.msra.mxu0 %v1104
        %1114 = vmatmul.bf16.gmra.mxu0 %v1101
        %v1115 = vpop.f32.mrf.mxu0
        %v1116 = vadd.f32 0.0, %v1115
        %v1117 = vpop.f32.mrf.mxu0
        %1118 = vdwg.mxu0
        %v1120 = vsel %vm1099, %v1092, 0
        %v1123 = vsel %vm1099, %v1096, 0
        %1125 = vmatpush.bf16.xpose.msra.mxu0 0
        %1126 = vmatpush.bf16.xpose.msra.mxu0 0
        %1127 = vmatpush.bf16.xpose.msra.mxu0 0
        %1128 = vmatpush.bf16.xpose.msra.mxu0 0
        %1129 = vmatpush.bf16.xpose.msra.mxu0 0
        %1130 = vmatpush.bf16.xpose.msra.mxu0 0
        %1131 = vmatpush.bf16.xpose.msra.mxu0 0
        %1132 = vmatpush.bf16.xpose.msra.mxu0 %v1123
        %1133 = vmatmul.bf16.gmra.mxu0 %v1120
        %v1134 = vpop.f32.mrf.mxu0
        %v1135 = vadd.f32 0.0, %v1134
        %v1136 = vpop.f32.mrf.mxu0
        %1137 = vdwg.mxu0
        %v1139 = vsel %vm1099, %v1093, 0
        %v1142 = vsel %vm1099, %v1097, 0
        %1144 = vmatpush.bf16.xpose.msra.mxu0 0
        %1145 = vmatpush.bf16.xpose.msra.mxu0 0
        %1146 = vmatpush.bf16.xpose.msra.mxu0 0
        %1147 = vmatpush.bf16.xpose.msra.mxu0 0
        %1148 = vmatpush.bf16.xpose.msra.mxu0 0
        %1149 = vmatpush.bf16.xpose.msra.mxu0 0
        %1150 = vmatpush.bf16.xpose.msra.mxu0 0
        %1151 = vmatpush.bf16.xpose.msra.mxu0 %v1142
        %1152 = vmatmul.bf16.gmra.mxu0 %v1139
        %v1153 = vpop.f32.mrf.mxu0
        %v1154 = vadd.f32 0.0, %v1153
        %v1155 = vpop.f32.mrf.mxu0
        %1156 = vdwg.mxu0
        %v1158 = vsel %vm1099, %v1094, 0
        %v1161 = vsel %vm1099, %v1098, 0
        %1163 = vmatpush.bf16.xpose.msra.mxu0 0
        %1164 = vmatpush.bf16.xpose.msra.mxu0 0
        %1165 = vmatpush.bf16.xpose.msra.mxu0 0
        %1166 = vmatpush.bf16.xpose.msra.mxu0 0
        %1167 = vmatpush.bf16.xpose.msra.mxu0 0
        %1168 = vmatpush.bf16.xpose.msra.mxu0 0
        %1169 = vmatpush.bf16.xpose.msra.mxu0 0
        %1170 = vmatpush.bf16.xpose.msra.mxu0 %v1161
        %1171 = vmatmul.bf16.gmra.mxu0 %v1158
        %v1172 = vpop.f32.mrf.mxu0
        %v1173 = vadd.f32 0.0, %v1172
        %v1174 = vpop.f32.mrf.mxu0
        %1175 = vdwg.mxu0
        %v1176 = vmul.f32 %v1116, 0.35355338
        %v1177 = vmul.f32 %v1135, 0.35355338
        %v1178 = vmul.f32 %v1154, 0.35355338
        %v1179 = vmul.f32 %v1173, 0.35355338
        %v1180 = vsel %vm1099, %v1176, -inf
        %1181 = vmax.xlane.f32.xlu0 %v1180
        %v1182 = vpop.xlane.xlu0 %1181
        %v1183 = vsel %vm1099, %v1177, -inf
        %1184 = vmax.xlane.f32.xlu0 %v1183
        %v1185 = vpop.xlane.xlu0 %1184
        %v1186 = vsel %vm1099, %v1178, -inf
        %1187 = vmax.xlane.f32.xlu0 %v1186
        %v1188 = vpop.xlane.xlu0 %1187
        %v1189 = vsel %vm1099, %v1179, -inf
        %1190 = vmax.xlane.f32.xlu0 %v1189
        %v1191 = vpop.xlane.xlu0 %1190
        %v1192 = vsub.f32 %v1176, %v1182
        %v1193 = vsub.f32 %v1177, %v1185
        %v1194 = vsub.f32 %v1178, %v1188
        %v1195 = vsub.f32 %v1179, %v1191
        %v1196 = vmul.f32 %v1192, 1.442695
        %v1197 = vpow.pop %v1196
        %v1198 = vmul.f32 %v1193, 1.442695
        %v1199 = vpow.pop %v1198
        %v1200 = vmul.f32 %v1194, 1.442695
        %v1201 = vpow.pop %v1200
        %v1202 = vmul.f32 %v1195, 1.442695
        %v1203 = vpow.pop %v1202
        %v1204 = vsel %vm1099, %v1197, 0.0
        %1205 = vadd.xlane.f32.xlu0 %v1204
        %v1206 = vpop.xlane.xlu0 %1205
        %v1207 = vsel %vm1099, %v1199, 0.0
        %1208 = vadd.xlane.f32.xlu0 %v1207
        %v1209 = vpop.xlane.xlu0 %1208
        %v1210 = vsel %vm1099, %v1201, 0.0
        %1211 = vadd.xlane.f32.xlu0 %v1210
        %v1212 = vpop.xlane.xlu0 %1211
        %v1213 = vsel %vm1099, %v1203, 0.0
        %1214 = vadd.xlane.f32.xlu0 %v1213
        %v1215 = vpop.xlane.xlu0 %1214
        %v1216 = vrcp.pop %v1206
        %v1217 = vrcp.pop %v1209
        %v1218 = vrcp.pop %v1212
        %v1219 = vrcp.pop %v1215
        %v1220 = vmul.f32 %v1197, %v1216
        %v1221 = vmul.f32 %v1199, %v1217
        %v1222 = vmul.f32 %v1201, %v1218
        %v1223 = vmul.f32 %v1203, %v1219
        %v1224 = vpack.c.bf16 %v1220, %v1220
        %v1225 = vpack.c.bf16 %v1221, %v1221
        %v1226 = vpack.c.bf16 %v1222, %v1222
        %v1227 = vpack.c.bf16 %v1223, %v1223
        %v1228 = vpack.c.bf16 %v1084, %v1084
        %v1229 = vpack.c.bf16 %v1086, %v1086
        %v1230 = vpack.c.bf16 %v1088, %v1088
        %v1231 = vpack.c.bf16 %v1090, %v1090
        %v1233 = vsel %vm1099, %v1224, 0
        %vm1235 = vcmask 1043456
        %v1237 = vsel %vm1235, %v1228, 0
        %1239 = vmatpush.bf16.msra.mxu0 0
        %1240 = vmatpush.bf16.msra.mxu0 0
        %1241 = vmatpush.bf16.msra.mxu0 0
        %1242 = vmatpush.bf16.msra.mxu0 0
        %1243 = vmatpush.bf16.msra.mxu0 0
        %1244 = vmatpush.bf16.msra.mxu0 0
        %1245 = vmatpush.bf16.msra.mxu0 0
        %1246 = vmatpush.bf16.msra.mxu0 %v1237
        %1247 = vmatmul.bf16.gmra.mxu0 %v1233
        %v1248 = vpop.f32.mrf.mxu0
        %v1249 = vadd.f32 0.0, %v1248
        %v1250 = vpop.f32.mrf.mxu0
        %1251 = vdwg.mxu0
        %v1253 = vsel %vm1099, %v1225, 0
        %v1256 = vsel %vm1235, %v1229, 0
        %1258 = vmatpush.bf16.msra.mxu0 0
        %1259 = vmatpush.bf16.msra.mxu0 0
        %1260 = vmatpush.bf16.msra.mxu0 0
        %1261 = vmatpush.bf16.msra.mxu0 0
        %1262 = vmatpush.bf16.msra.mxu0 0
        %1263 = vmatpush.bf16.msra.mxu0 0
        %1264 = vmatpush.bf16.msra.mxu0 0
        %1265 = vmatpush.bf16.msra.mxu0 %v1256
        %1266 = vmatmul.bf16.gmra.mxu0 %v1253
        %v1267 = vpop.f32.mrf.mxu0
        %v1268 = vadd.f32 0.0, %v1267
        %v1269 = vpop.f32.mrf.mxu0
        %1270 = vdwg.mxu0
        %v1272 = vsel %vm1099, %v1226, 0
        %v1275 = vsel %vm1235, %v1230, 0
        %1277 = vmatpush.bf16.msra.mxu0 0
        %1278 = vmatpush.bf16.msra.mxu0 0
        %1279 = vmatpush.bf16.msra.mxu0 0
        %1280 = vmatpush.bf16.msra.mxu0 0
        %1281 = vmatpush.bf16.msra.mxu0 0
        %1282 = vmatpush.bf16.msra.mxu0 0
        %1283 = vmatpush.bf16.msra.mxu0 0
        %1284 = vmatpush.bf16.msra.mxu0 %v1275
        %1285 = vmatmul.bf16.gmra.mxu0 %v1272
        %v1286 = vpop.f32.mrf.mxu0
        %v1287 = vadd.f32 0.0, %v1286
        %v1288 = vpop.f32.mrf.mxu0
        %1289 = vdwg.mxu0
        %v1291 = vsel %vm1099, %v1227, 0
        %v1294 = vsel %vm1235, %v1231, 0
        %1296 = vmatpush.bf16.msra.mxu0 0
        %1297 = vmatpush.bf16.msra.mxu0 0
        %1298 = vmatpush.bf16.msra.mxu0 0
        %1299 = vmatpush.bf16.msra.mxu0 0
        %1300 = vmatpush.bf16.msra.mxu0 0
        %1301 = vmatpush.bf16.msra.mxu0 0
        %1302 = vmatpush.bf16.msra.mxu0 0
        %1303 = vmatpush.bf16.msra.mxu0 %v1294
        %1304 = vmatmul.bf16.gmra.mxu0 %v1291
        %v1305 = vpop.f32.mrf.mxu0
        %v1306 = vadd.f32 0.0, %v1305
        %v1307 = vpop.f32.mrf.mxu0
        %1308 = vdwg.mxu0
        %v1309 = vrot.slane %v1287, 4
        %v1310 = vsel %vm737, %v1309, %v1249
        %v1311 = vrot.slane %v1249, 4
        %v1312 = vsel %vm737, %v1287, %v1311
        %v1314 = vunpack.c.l.s4 1983009808
        %v1315 = vunpack.c.0.s8 %v1314
        %v1316 = vperm.slane %v1310, %v1315
        %v1318 = vunpack.c.l.s4 1983009808
        %v1319 = vunpack.c.0.s8 %v1318
        %v1320 = vperm.slane %v1312, %v1319
        %v1321 = vrot.slane %v1306, 4
        %v1322 = vsel %vm737, %v1321, %v1268
        %v1323 = vrot.slane %v1268, 4
        %v1324 = vsel %vm737, %v1306, %v1323
        %v1326 = vunpack.c.l.s4 1983009808
        %v1327 = vunpack.c.0.s8 %v1326
        %v1328 = vperm.slane %v1322, %v1327
        %v1330 = vunpack.c.l.s4 1983009808
        %v1331 = vunpack.c.0.s8 %v1330
        %v1332 = vperm.slane %v1324, %v1331
        %v1333 = vrot.slane %v1328, 4
        %v1334 = vsel %vm737, %v1333, %v1316
        %v1335 = vrot.slane %v1316, 4
        %v1336 = vsel %vm737, %v1328, %v1335
        %v1338 = vunpack.c.l.s4 1934713408
        %v1339 = vunpack.c.0.s8 %v1338
        %v1340 = vperm.slane %v1334, %v1339
        %v1342 = vunpack.c.l.s4 1934713408
        %v1343 = vunpack.c.0.s8 %v1342
        %v1344 = vperm.slane %v1336, %v1343
        %v1345 = vrot.slane %v1332, 4
        %v1346 = vsel %vm737, %v1345, %v1320
        %v1347 = vrot.slane %v1320, 4
        %v1348 = vsel %vm737, %v1332, %v1347
        %v1350 = vunpack.c.l.s4 1934713408
        %v1351 = vunpack.c.0.s8 %v1350
        %v1352 = vperm.slane %v1346, %v1351
        %v1354 = vunpack.c.l.s4 1934713408
        %v1355 = vunpack.c.0.s8 %v1354
        %v1356 = vperm.slane %v1348, %v1355
        %v1357 = vrot.slane %v1340, 4
        %v1358 = vsel %vm737, 0.0, %v1357
        %v1359 = vrot.slane %v1344, 4
        %v1360 = vsel %vm737, 0.0, %v1359
        %v1361 = vrot.slane %v1352, 4
        %v1362 = vsel %vm737, 0.0, %v1361
        %v1363 = vrot.slane %v1356, 4
        %v1364 = vsel %vm737, 0.0, %v1363
        %v1365 = vsel %vm737, %v1359, %v1340
        %v1367 = vunpack.c.l.s4 1983009808
        %v1368 = vunpack.c.0.s8 %v1367
        %v1369 = vperm.slane %v1365, %v1368
        %v1370 = vrot.slane %v1360, 4
        %v1371 = vsel %vm737, %v1370, %v1358
        %v1373 = vunpack.c.l.s4 1983009808
        %v1374 = vunpack.c.0.s8 %v1373
        %v1375 = vperm.slane %v1371, %v1374
        %v1376 = vsel %vm737, %v1363, %v1352
        %v1378 = vunpack.c.l.s4 1983009808
        %v1379 = vunpack.c.0.s8 %v1378
        %v1380 = vperm.slane %v1376, %v1379
        %v1381 = vrot.slane %v1364, 4
        %v1382 = vsel %vm737, %v1381, %v1362
        %v1384 = vunpack.c.l.s4 1983009808
        %v1385 = vunpack.c.0.s8 %v1384
        %v1386 = vperm.slane %v1382, %v1385
        %v1387 = vrot.slane %v1375, 4
        %v1388 = vsel %vm737, %v1387, %v1369
        %v1389 = vrot.slane %v1369, 4
        %v1390 = vsel %vm737, %v1375, %v1389
        %v1392 = vunpack.c.l.s4 1934713408
        %v1393 = vunpack.c.0.s8 %v1392
        %v1394 = vperm.slane %v1388, %v1393
        %v1396 = vunpack.c.l.s4 1934713408
        %v1397 = vunpack.c.0.s8 %v1396
        %v1398 = vperm.slane %v1390, %v1397
        %v1399 = vrot.slane %v1386, 4
        %v1400 = vsel %vm737, %v1399, %v1380
        %v1401 = vrot.slane %v1380, 4
        %v1402 = vsel %vm737, %v1386, %v1401
        %v1404 = vunpack.c.l.s4 1934713408
        %v1405 = vunpack.c.0.s8 %v1404
        %v1406 = vperm.slane %v1400, %v1405
        %v1408 = vunpack.c.l.s4 1934713408
        %v1409 = vunpack.c.0.s8 %v1408
        %v1410 = vperm.slane %v1402, %v1409
        %v1411 = vrot.slane %v1406, 4
        %v1412 = vsel %vm737, %v1411, %v1394
        %v1413 = vrot.slane %v1394, 4
        %v1414 = vsel %vm737, %v1406, %v1413
        %v1415 = vrot.slane %v1410, 4
        %v1416 = vsel %vm737, %v1415, %v1398
        %v1417 = vrot.slane %v1398, 4
        %v1418 = vsel %vm737, %v1410, %v1417
        %1420 = vrot.lane.b32.xlu0 %v1414, 8
        %v1421 = vpop.permute.xlu0 %1420
        %1424 = vrot.lane.b32.xlu0 %v1416, 16
        %v1425 = vpop.permute.xlu0 %1424
        %1428 = vrot.lane.b32.xlu0 %v1418, 24
        %v1429 = vpop.permute.xlu0 %1428
        %v1431 = vsel %vm1099, %v1412, %v1421
        %vm1432 = vcmask 130048
        %v1433 = vsel %vm1432, %v1431, %v1425
        %vm1434 = vcmask 195584
        %v1435 = vsel %vm1434, %v1433, %v1429
        %v1436 = vpack.c.bf16 %v1435, %v1435
        %v1437 = vld [vmem:[%s614] sm:$0xf]
        %v1438 = vld [vmem:[%s614 + $0x4] sm:$0xf]
        %v1439 = vld [vmem:[%s614 + $0x8] sm:$0xf]
        %v1440 = vld [vmem:[%s614 + $0xc] sm:$0xf]
        %v1441 = vld [vmem:[%s617] sm:$0x1]
        %v1443 = vperm.slane %v1441, 0
        %v1449 = vunpack.c.l.b16 %v1437
        %v1450 = vunpack.c.l.b16 %v1438
        %v1451 = vunpack.c.l.b16 %v1439
        %v1452 = vunpack.c.l.b16 %v1440
        %v1453 = vpack.c.b16 %v1450, %v1449
        %v1454 = vpack.c.b16 %v1452, %v1451
        %v1458 = vsel %vm651, %v1436, 0
        %1460 = vmatpush.bf16.msra.mxu0 0
        %1461 = vmatpush.bf16.msra.mxu0 0
        %1462 = vmatpush.bf16.msra.mxu0 0
        %1463 = vmatpush.bf16.msra.mxu0 0
        %1464 = vmatpush.bf16.msra.mxu0 0
        %1465 = vmatpush.bf16.msra.mxu0 0
        %1466 = vmatpush.bf16.msra.mxu0 %v1454
        %1467 = vmatpush.bf16.msra.mxu0 %v1453
        %1468 = vmatmul.bf16.gmra.mxu0 %v1458
        %v1469 = vpop.f32.mrf.mxu0
        %v1470 = vadd.f32 %v1443, %v1469
        %v1471 = vpop.f32.mrf.mxu0
        %1472 = vdwg.mxu0
        %v1473 = vadd.f32 %v648, %v1470
        %v1474 = vld [vmem:[%s620] sm:$0x1]
        %v1475 = vld [vmem:[%s623] sm:$0x1]
        %v1476 = vsel %vm651, %v1473, 0.0
        %1477 = vadd.xlane.f32.xlu0 %v1476
        %v1478 = vpop.xlane.xlu0 %1477
        %v1479 = vmul.f32 %v1478, %v661
        %v1480 = vsub.f32 %v1473, %v1479
        %v1481 = vmul.f32 %v1480, %v1480
        %v1482 = vsel %vm651, %v1481, 0.0
        %1483 = vadd.xlane.f32.xlu0 %v1482
        %v1484 = vpop.xlane.xlu0 %1483
        %v1485 = vmul.f32 %v1484, %v661
        %v1486 = vadd.f32 %v1485, 1e-05
        %v1487 = vrsqrt.pop %v1486
        %v1488 = vmul.f32 %v1487, %v1486
        %v1489 = vmul.f32 %v1488, %v1487
        %v1490 = vmul.f32 0.5, %v1489
        %v1491 = vsub.f32 1.5, %v1490
        %v1492 = vmul.f32 %v1487, %v1491
        %vm1493 = vweird.f32 %v1486
        %vm1494 = vweird.f32 %v1487
        %vm1495 = vmor %vm1493, %vm1494
        %v1496 = vsel %vm1495, %v1487, %v1492
        %v1497 = vmul.f32 %v1480, %v1496
        %v1499 = vperm.slane %v1474, 0
        %v1501 = vmul.f32 %v1497, %v1499
        %v1503 = vperm.slane %v1475, 0
        %v1505 = vadd.f32 %v1501, %v1503
        %v1506 = vpack.c.bf16 %v1505, %v1505
        %v1507 = vld [vmem:[%s628] sm:$0xf]
        %v1508 = vld [vmem:[%s628 + $0x4] sm:$0xf]
        %v1509 = vld [vmem:[%s628 + $0x8] sm:$0xf]
        %v1510 = vld [vmem:[%s628 + $0xc] sm:$0xf]
        %v1511 = vld [vmem:[%s631] sm:$0x1]
        %v1513 = vperm.slane %v1511, 0
        %v1519 = vunpack.c.l.b16 %v1507
        %v1520 = vunpack.c.l.b16 %v1508
        %v1521 = vunpack.c.l.b16 %v1509
        %v1522 = vunpack.c.l.b16 %v1510
        %v1523 = vpack.c.b16 %v1520, %v1519
        %v1524 = vpack.c.b16 %v1522, %v1521
        %v1528 = vsel %vm651, %v1506, 0
        %1530 = vmatpush.bf16.msra.mxu0 0
        %1531 = vmatpush.bf16.msra.mxu0 0
        %1532 = vmatpush.bf16.msra.mxu0 0
        %1533 = vmatpush.bf16.msra.mxu0 0
        %1534 = vmatpush.bf16.msra.mxu0 0
        %1535 = vmatpush.bf16.msra.mxu0 0
        %1536 = vmatpush.bf16.msra.mxu0 %v1524
        %1537 = vmatpush.bf16.msra.mxu0 %v1523
        %1538 = vmatmul.bf16.gmra.mxu0 %v1528
        %v1539 = vpop.f32.mrf.mxu0
        %v1540 = vadd.f32 %v1513, %v1539
        %v1541 = vpop.f32.mrf.mxu0
        %1542 = vdwg.mxu0
        %v1543 = vmul.f32 %v1540, 0.5
        %v1544 = vmul.f32 %v1540, 0.044715
        %v1545 = vmul.f32 %v1544, %v1540
        %v1546 = vmul.f32 %v1545, %v1540
        %v1547 = vadd.f32 %v1540, %v1546
        %v1548 = vmul.f32 %v1547, 0.7978846
        %v1549 = vtanh.pop %v1548
        %v1550 = vadd.f32 %v1549, 1.0
        %v1551 = vmul.f32 %v1543, %v1550
        %v1552 = vpack.c.bf16 %v1551, %v1551
        %v1553 = vld [vmem:[%s636] sm:$0xf]
        %v1554 = vld [vmem:[%s636 + $0x4] sm:$0xf]
        %v1555 = vld [vmem:[%s636 + $0x8] sm:$0xf]
        %v1556 = vld [vmem:[%s636 + $0xc] sm:$0xf]
        %v1557 = vld [vmem:[%s636 + $0x10] sm:$0xf]
        %v1558 = vld [vmem:[%s636 + $0x14] sm:$0xf]
        %v1559 = vld [vmem:[%s636 + $0x18] sm:$0xf]
        %v1560 = vld [vmem:[%s636 + $0x1c] sm:$0xf]
        %v1561 = vld [vmem:[%s636 + $0x20] sm:$0xf]
        %v1562 = vld [vmem:[%s636 + $0x24] sm:$0xf]
        %v1563 = vld [vmem:[%s636 + $0x28] sm:$0xf]
        %v1564 = vld [vmem:[%s636 + $0x2c] sm:$0xf]
        %v1565 = vld [vmem:[%s636 + $0x30] sm:$0xf]
        %v1566 = vld [vmem:[%s636 + $0x34] sm:$0xf]
        %v1567 = vld [vmem:[%s636 + $0x38] sm:$0xf]
        %v1568 = vld [vmem:[%s636 + $0x3c] sm:$0xf]
        %v1569 = vld [vmem:[%s639] sm:$0x1]
        %v1571 = vperm.slane %v1569, 0
        %v1589 = vunpack.c.l.b16 %v1553
        %v1590 = vunpack.c.l.b16 %v1554
        %v1591 = vunpack.c.l.b16 %v1555
        %v1592 = vunpack.c.l.b16 %v1556
        %v1593 = vunpack.c.l.b16 %v1557
        %v1594 = vunpack.c.l.b16 %v1558
        %v1595 = vunpack.c.l.b16 %v1559
        %v1596 = vunpack.c.l.b16 %v1560
        %v1597 = vunpack.c.l.b16 %v1561
        %v1598 = vunpack.c.l.b16 %v1562
        %v1599 = vunpack.c.l.b16 %v1563
        %v1600 = vunpack.c.l.b16 %v1564
        %v1601 = vunpack.c.l.b16 %v1565
        %v1602 = vunpack.c.l.b16 %v1566
        %v1603 = vunpack.c.l.b16 %v1567
        %v1604 = vunpack.c.l.b16 %v1568
        %v1605 = vpack.c.b16 %v1590, %v1589
        %v1606 = vpack.c.b16 %v1592, %v1591
        %v1607 = vpack.c.b16 %v1594, %v1593
        %v1608 = vpack.c.b16 %v1596, %v1595
        %v1609 = vpack.c.b16 %v1598, %v1597
        %v1610 = vpack.c.b16 %v1600, %v1599
        %v1611 = vpack.c.b16 %v1602, %v1601
        %v1612 = vpack.c.b16 %v1604, %v1603
        %1621 = vmatpush.bf16.msra.mxu0 %v1612
        %1622 = vmatpush.bf16.msra.mxu0 %v1611
        %1623 = vmatpush.bf16.msra.mxu0 %v1610
        %1624 = vmatpush.bf16.msra.mxu0 %v1609
        %1625 = vmatpush.bf16.msra.mxu0 %v1608
        %1626 = vmatpush.bf16.msra.mxu0 %v1607
        %1627 = vmatpush.bf16.msra.mxu0 %v1606
        %1628 = vmatpush.bf16.msra.mxu0 %v1605
        %1629 = vmatmul.bf16.gmra.mxu0 %v1552
        %v1630 = vpop.f32.mrf.mxu0
        %v1631 = vadd.f32 %v1571, %v1630
        %v1632 = vpop.f32.mrf.mxu0
        %1633 = vdwg.mxu0
        %v1634 = vadd.f32 %v1473, %v1631
        %1635 = vst.msk [vmem:[#allocation2] sm:$0xff] %vm651, %v1634
        %p1636 = scmp.eq.s32.totalorder %s32, 11
        // Predicated region
        $region77: #{tpu_custom_call.1} parent=71 // pred_check
          %p1637 = pneg %p1636
        $region78: #{tpu_custom_call.1} parent=71 // pred_check_branch
          %1639 = sbr.rel (%p1637) target = $region80
        $region79: #{tpu_custom_call.1} parent=71 // pred_region
          %1640 = vst.msk [vmem:[%s591] sm:$0xff] %vm651, %v1634
        $region80: #{tpu_custom_call.1} parent=71 // pred_fallthru
          _
        %s1641 = sand.u32 %s385, 1
        %s1642 = scalar_lea.sflag [#allocation4], %s1641
        %s1643 = sand.u32 %s385, 1
        %s1644 = smul.addr %s1643, 8
        %s1645 = scalar_lea.vmem [#allocation3], %s1644
        // Predicated region
        $region81: #{tpu_custom_call.1} parent=71 // pred_check
          %p1646 = pneg %p395
        $region82: #{tpu_custom_call.1} parent=71 // pred_check_branch
          %1648 = sbr.rel (%p1646) target = $region84
        $region83: #{tpu_custom_call.1} parent=71 // pred_region
          %1650 = vsyncadd %s1642, 0
          %s1651 = smul.addr %s31, 8
          %s1652 = scalar_lea.hbm %s13, %s1651
          %s1654 = sshll.u32 %s1645, 4
          %s1655 = int_to_ptr.vmem [resolvable:$true] %s1654
          %s1656 = sshll.u32 %s1652, 4
          %s1657 = int_to_ptr.hbm [resolvable:$true] %s1656
          %1659 = dma.vmem_to_hbm [thread:$0]  %s1655, 128, %s1657, %s1642
        $region84: #{tpu_custom_call.1} parent=71 // pred_fallthru
          _
      $region72: #{tpu_custom_call.1} parent=5 // pred_fallthru
        _
      %p1660 = scmp.le.s32.totalorder 2, %s22
      // Predicated region
      $region85: #{tpu_custom_call.1} parent=5 // pred_check
        %p1661 = pneg %p1660
      $region86: #{tpu_custom_call.1} parent=5 // pred_check_branch
        %1663 = sbr.rel (%p1661) target = $region88
      $region87: #{tpu_custom_call.1} parent=5 // pred_region
        %s1664 = ssub.s32 %s22, 2
        // Predicated region
        $region89: #{tpu_custom_call.1} parent=87 // pred_check
          %p1665 = pneg %p401
        $region90: #{tpu_custom_call.1} parent=87 // pred_check_branch
          %1667 = sbr.rel (%p1665) target = $region92
        $region91: #{tpu_custom_call.1} parent=87 // pred_region
          %s1668 = sand.u32 %s386, 1
          %s1669 = scalar_lea.sflag [#allocation4], %s1668
          %s1670 = sand.u32 %s386, 1
          %s1671 = smul.addr %s1670, 8
          %s1672 = scalar_lea.vmem [#allocation3], %s1671
          %1674 = dma.done %s1669, 128
        $region92: #{tpu_custom_call.1} parent=87 // pred_fallthru
          _
      $region88: #{tpu_custom_call.1} parent=5 // pred_fallthru
        _
    $region6: #{tpu_custom_call.1} parent=1 // loop_footer
      %s26 = sadd.s32 1, %s22
    $region7: #{tpu_custom_call.1} parent=1 // loop_footer_branch
      %21 = sbr.rel target = $region3
    $region8: #{tpu_custom_call.1} parent=1 // loop_exit
      _
    %1675 = vsyncpa [#allocation4], 1
    %s1676 = scalar_lea.sflag [#allocation4], 1
    %1677 = vsyncpa %s1676, 1

</llo_original>
